<compile_context>
chip_gen: v5e
topology: v5e:2x2
jax: 0.10.0
libtpu: 0.0.40
codegen_flags: <defaults>
</compile_context>

<pallas_src>
import functools
import math

import jax
import jax.numpy as jnp
from jax import lax
from jax.experimental import pallas as pl
from jax.experimental.pallas import tpu as pltpu

_VMEM_LIMIT = 32 * 1024 * 1024  # explicit scoped-VMEM limit (safe on v5e/v6e/v7x)


# ----------------------------- in-kernel helpers --------------------------- #

def _layernorm(v, g, b, eps):
    mu = jnp.mean(v, axis=-1, keepdims=True)
    var = jnp.mean((v - mu) ** 2, axis=-1, keepdims=True)
    return (v - mu) * lax.rsqrt(var + eps) * g + b


def _gelu(v):
    # SwissArmyTransformer's gelu_impl (tanh approximation)
    return 0.5 * v * (1.0 + jnp.tanh(0.7978845608028654 * v * (1.0 + 0.044715 * v * v)))


# ----------------------------- kernels ------------------------------------ #

def attention_block_kernel(
    x_ref, bias_ref,
    ln1_g, ln1_b, qkv_w, qkv_b, dense_w, dense_b, ln3_g, ln3_b,
    out_ref, *, num_heads, eps,
):
    x = x_ref[0]              # (S, H) fp32
    bias = bias_ref[...]      # (S, S) fp32 additive mask bias  (-10000 * (1 - mask))
    S, H = x.shape
    hd = H // num_heads

    # input layernorm (fp32 math)
    ln1 = _layernorm(x, ln1_g[...], ln1_b[...], eps)

    # fused QKV projection: bf16 operands, fp32 MXU accumulation.
    # The 1/sqrt(hd) query scale is folded into qkv_w / qkv_b in prepare_params().
    qkv = jnp.dot(ln1.astype(jnp.bfloat16), qkv_w[...],
                  preferred_element_type=jnp.float32) + qkv_b[...]

    # Split heads into a leading batch dim.  The per-head slices are cheap static
    # lane slices (layout plumbing only); every matmul / softmax below is batched
    # over all heads in a single MXU contraction.
    def split_heads(base):    # -> (num_heads, S, hd)
        return jnp.stack(
            [qkv[:, base + h * hd: base + (h + 1) * hd] for h in range(num_heads)],
            axis=0)

    q = split_heads(0).astype(jnp.bfloat16)
    k = split_heads(H).astype(jnp.bfloat16)
    v = split_heads(2 * H).astype(jnp.bfloat16)

    # batched multi-head standard_attention
    scores = jnp.einsum('hqd,hkd->hqk', q, k, preferred_element_type=jnp.float32)
    scores = scores + bias[None, :, :]
    scores = scores - jnp.max(scores, axis=-1, keepdims=True)
    probs = jnp.exp(scores)
    probs = probs * pl.reciprocal(jnp.sum(probs, axis=-1, keepdims=True), approx=True)
    ctx = jnp.einsum('hqk,hkd->hqd', probs.astype(jnp.bfloat16), v,
                     preferred_element_type=jnp.float32)        # (nh, S, hd)

    # merge heads back to (S, H)
    context = jnp.concatenate([ctx[h] for h in range(num_heads)], axis=-1)

    # attention output projection + sandwich LN (third) + residual
    attn = jnp.dot(context.astype(jnp.bfloat16), dense_w[...],
                   preferred_element_type=jnp.float32) + dense_b[...]
    attn = _layernorm(attn, ln3_g[...], ln3_b[...], eps)
    out_ref[0] = x + attn


def mlp_block_kernel(
    x_ref, ln2_g, ln2_b, fc1_w, fc1_b, fc2_w, fc2_b, ln4_g, ln4_b,
    out_ref, acc_ref, *, eps,
):
    # grid = (batch, seq-tile, ffn-tile); the ffn axis streams fc1/fc2 weight tiles
    # and reduces into a fp32 VMEM accumulator.
    f = pl.program_id(2)

    @pl.when(f == 0)
    def _():
        acc_ref[...] = jnp.zeros_like(acc_ref)

    x = x_ref[0]                                            # (tS, H) residual input
    ln2 = _layernorm(x, ln2_g[...], ln2_b[...], eps)
    h1 = jnp.dot(ln2.astype(jnp.bfloat16), fc1_w[...],
                 preferred_element_type=jnp.float32) + fc1_b[...]
    h1 = _gelu(h1)                                          # fp32, (tS, tF)
    acc_ref[...] += jnp.dot(h1.astype(jnp.bfloat16), fc2_w[...],
                            preferred_element_type=jnp.float32)

    @pl.when(f == pl.num_programs(2) - 1)
    def _():
        mlp = acc_ref[...] + fc2_b[...]
        mlp = _layernorm(mlp, ln4_g[...], ln4_b[...], eps)  # sandwich LN (fourth)
        out_ref[0] = x + mlp


def final_logits_kernel(x_ref, lnf_g, lnf_b, emb_ref, out_ref, *, eps):
    # grid = (batch, vocab-tile); emb_ref is a (tV, H) bf16 tile of word_embeddings.
    x = x_ref[0]                                            # (S, H)
    ln = _layernorm(x, lnf_g[...], lnf_b[...], eps)
    # logits tile = LN(x) @ word_embeddings[tile].T, contracted directly
    # (no HBM transpose of the embedding table).
    out_ref[0] = lax.dot_general(
        ln.astype(jnp.bfloat16), emb_ref[...],
        dimension_numbers=(((1,), (1,)), ((), ())),
        preferred_element_type=jnp.float32)


# ----------------------------- wrappers ------------------------------------ #

def _const_spec(shape):
    nd = len(shape)
    return lambda *_args, _nd=nd: (0,) * _nd


def run_attention_block(x, mask_bias, lw, *, num_heads, eps):
    B, S, H = x.shape
    weights = [lw["ln1_g"], lw["ln1_b"], lw["qkv_w"], lw["qkv_b"],
               lw["dense_w"], lw["dense_b"], lw["ln3_g"], lw["ln3_b"]]
    in_specs = [
        pl.BlockSpec((1, S, H), lambda b: (b, 0, 0)),
        pl.BlockSpec((S, S), lambda b: (0, 0)),
    ] + [pl.BlockSpec(w.shape, _const_spec(w.shape)) for w in weights]

    kernel = functools.partial(attention_block_kernel, num_heads=num_heads, eps=eps)
    return pl.pallas_call(
        kernel,
        out_shape=jax.ShapeDtypeStruct((B, S, H), jnp.float32),
        grid=(B,),
        in_specs=in_specs,
        out_specs=pl.BlockSpec((1, S, H), lambda b: (b, 0, 0)),
        compiler_params=pltpu.CompilerParams(
            dimension_semantics=("parallel",),
            vmem_limit_bytes=_VMEM_LIMIT),
    )(x, mask_bias, *weights)


def run_mlp_block(x, lw, *, eps, seq_tile=8, ff_tile=128):
    B, S, H = x.shape
    F = lw["fc1_w"].shape[1]
    tS = seq_tile if (S % seq_tile == 0) else S
    tF = ff_tile if (F % ff_tile == 0) else F

    kernel = functools.partial(mlp_block_kernel, eps=eps)
    return pl.pallas_call(
        kernel,
        out_shape=jax.ShapeDtypeStruct((B, S, H), jnp.float32),
        grid=(B, S // tS, F // tF),
        in_specs=[
            pl.BlockSpec((1, tS, H), lambda b, s, f: (b, s, 0)),
            pl.BlockSpec(lw["ln2_g"].shape, _const_spec(lw["ln2_g"].shape)),
            pl.BlockSpec(lw["ln2_b"].shape, _const_spec(lw["ln2_b"].shape)),
            pl.BlockSpec((H, tF), lambda b, s, f: (0, f)),
            pl.BlockSpec((1, tF), lambda b, s, f: (0, f)),
            pl.BlockSpec((tF, H), lambda b, s, f: (f, 0)),
            pl.BlockSpec(lw["fc2_b"].shape, _const_spec(lw["fc2_b"].shape)),
            pl.BlockSpec(lw["ln4_g"].shape, _const_spec(lw["ln4_g"].shape)),
            pl.BlockSpec(lw["ln4_b"].shape, _const_spec(lw["ln4_b"].shape)),
        ],
        out_specs=pl.BlockSpec((1, tS, H), lambda b, s, f: (b, s, 0)),
        scratch_shapes=[pltpu.VMEM((tS, H), jnp.float32)],
        compiler_params=pltpu.CompilerParams(
            dimension_semantics=("parallel", "parallel", "arbitrary"),
            vmem_limit_bytes=_VMEM_LIMIT),
    )(x, lw["ln2_g"], lw["ln2_b"], lw["fc1_w"], lw["fc1_b"],
      lw["fc2_w"], lw["fc2_b"], lw["ln4_g"], lw["ln4_b"])


def run_final_logits(x, lnf_g, lnf_b, word_emb_bf16, *, eps, vocab_tile=128):
    B, S, H = x.shape
    V = word_emb_bf16.shape[0]
    tV = vocab_tile if (V % vocab_tile == 0) else V

    kernel = functools.partial(final_logits_kernel, eps=eps)
    return pl.pallas_call(
        kernel,
        out_shape=jax.ShapeDtypeStruct((B, S, V), jnp.float32),
        grid=(B, V // tV),
        in_specs=[
            pl.BlockSpec((1, S, H), lambda b, v: (b, 0, 0)),
            pl.BlockSpec(lnf_g.shape, _const_spec(lnf_g.shape)),
            pl.BlockSpec(lnf_b.shape, _const_spec(lnf_b.shape)),
            pl.BlockSpec((tV, H), lambda b, v: (v, 0)),
        ],
        out_specs=pl.BlockSpec((1, S, tV), lambda b, v: (b, 0, v)),
        compiler_params=pltpu.CompilerParams(
            dimension_semantics=("parallel", "parallel"),
            vmem_limit_bytes=_VMEM_LIMIT),
    )(x, lnf_g, lnf_b, word_emb_bf16)


def prepare_params(params, *, num_heads):
    """One-time preprocessing: fold 1/sqrt(hd) into Q weights and cast matmul
    weights to bf16 (fp32 accumulation happens on the MXU)."""
    H = params["word_emb"].shape[1]
    hd = H // num_heads
    scale = 1.0 / math.sqrt(hd)

    prepared = {
        "word_emb": params["word_emb"],                         # fp32 for the gather
        "pos_emb": params["pos_emb"],
        "word_emb_bf16": params["word_emb"].astype(jnp.bfloat16),
        "final_ln_g": params["final_ln_g"],
        "final_ln_b": params["final_ln_b"],
        "layers": [],
    }
    for lw in params["layers"]:
        qkv_w = lw["qkv_w"].at[:, :H].multiply(scale)
        qkv_b = lw["qkv_b"].at[:, :H].multiply(scale)
        prepared["layers"].append({
            "ln1_g": lw["ln1_g"], "ln1_b": lw["ln1_b"],
            "qkv_w": qkv_w.astype(jnp.bfloat16), "qkv_b": qkv_b,
            "dense_w": lw["dense_w"].astype(jnp.bfloat16), "dense_b": lw["dense_b"],
            "ln3_g": lw["ln3_g"], "ln3_b": lw["ln3_b"],
            "ln2_g": lw["ln2_g"], "ln2_b": lw["ln2_b"],
            "fc1_w": lw["fc1_w"].astype(jnp.bfloat16), "fc1_b": lw["fc1_b"],
            "fc2_w": lw["fc2_w"].astype(jnp.bfloat16), "fc2_b": lw["fc2_b"],
            "ln4_g": lw["ln4_g"], "ln4_b": lw["ln4_b"],
        })
    return prepared


def base_transformer_forward(prepared, input_ids, position_ids, attention_mask,
                             *, num_heads, eps):
    # embedding (glue: gathers in plain JAX)
    hidden = prepared["word_emb"][input_ids] + prepared["pos_emb"][position_ids]
    hidden = hidden.astype(jnp.float32)

    S = input_ids.shape[1]
    # mask is [1, 1, S, S] broadcast over batch & heads; precompute additive bias once.
    mask2d = attention_mask.reshape(S, S).astype(jnp.float32)
    mask_bias = -10000.0 * (1.0 - mask2d)

    for lw in prepared["layers"]:
        ln_input = run_attention_block(hidden, mask_bias, lw, num_heads=num_heads, eps=eps)
        hidden = run_mlp_block(ln_input, lw, eps=eps)

    logits = run_final_logits(hidden, prepared["final_ln_g"], prepared["final_ln_b"],
                              prepared["word_emb_bf16"], eps=eps)
    # parallel_output=True, no hooks, no branch_input -> outputs = [logits_parallel, ...]
    return logits


# ----------------------------- init & reference ---------------------------- #

def init_params(key, *, num_layers, vocab, hidden, max_seq, init_std=0.02):
    out_std = init_std / math.sqrt(2.0 * num_layers)  # scaled_init_method
    keys = jax.random.split(key, 2 + 4 * num_layers)

    def normal(k, shape, std):
        return (std * jax.random.normal(k, shape)).astype(jnp.float32)

    params = {
        "word_emb": normal(keys[0], (vocab, hidden), 0.02),
        "pos_emb": normal(keys[1], (max_seq, hidden), init_std),
        "final_ln_g": jnp.ones((1, hidden), jnp.float32),
        "final_ln_b": jnp.zeros((1, hidden), jnp.float32),
        "layers": [],
    }
    for l in range(num_layers):
        k = keys[2 + 4 * l:2 + 4 * (l + 1)]
        lw = {
            "ln1_g": jnp.ones((1, hidden), jnp.float32),
            "ln1_b": jnp.zeros((1, hidden), jnp.float32),
            # weights pre-transposed to (in, out)
            "qkv_w": normal(k[0], (hidden, 3 * hidden), init_std),
            "qkv_b": jnp.zeros((1, 3 * hidden), jnp.float32),
            "dense_w": normal(k[1], (hidden, hidden), out_std),
            "dense_b": jnp.zeros((1, hidden), jnp.float32),
            "ln3_g": jnp.ones((1, hidden), jnp.float32),
            "ln3_b": jnp.zeros((1, hidden), jnp.float32),
            "ln2_g": jnp.ones((1, hidden), jnp.float32),
            "ln2_b": jnp.zeros((1, hidden), jnp.float32),
            "fc1_w": normal(k[2], (hidden, 4 * hidden), init_std),
            "fc1_b": jnp.zeros((1, 4 * hidden), jnp.float32),
            "fc2_w": normal(k[3], (4 * hidden, hidden), out_std),
            "fc2_b": jnp.zeros((1, hidden), jnp.float32),
            "ln4_g": jnp.ones((1, hidden), jnp.float32),
            "ln4_b": jnp.zeros((1, hidden), jnp.float32),
        }
        params["layers"].append(lw)
    return params


def reference_forward(params, input_ids, position_ids, attention_mask, *, num_heads, eps):
    """Pure-JAX fp32 reference mirroring the PyTorch forward (eval mode)."""
    B, S = input_ids.shape
    H = params["word_emb"].shape[1]
    hd = H // num_heads
    h = params["word_emb"][input_ids] + params["pos_emb"][position_ids]
    mask = attention_mask.astype(jnp.float32)  # (1,1,S,S)

    def ln(v, g, b):
        mu = jnp.mean(v, axis=-1, keepdims=True)
        var = jnp.mean((v - mu) ** 2, axis=-1, keepdims=True)
        return (v - mu) / jnp.sqrt(var + eps) * g[0] + b[0]

    for lw in params["layers"]:
        x1 = ln(h, lw["ln1_g"], lw["ln1_b"])
        qkv = x1 @ lw["qkv_w"] + lw["qkv_b"][0]
        q, k, v = jnp.split(qkv, 3, axis=-1)

        def heads(t):  # (B,S,H) -> (B,nh,S,hd)
            return t.reshape(B, S, num_heads, hd).transpose(0, 2, 1, 3)

        qh, kh, vh = heads(q), heads(k), heads(v)
        scores = jnp.einsum("bnsd,bntd->bnst", qh / math.sqrt(hd), kh)
        scores = scores * mask - 10000.0 * (1.0 - mask)
        probs = jax.nn.softmax(scores, axis=-1)
        ctx = jnp.einsum("bnst,bntd->bnsd", probs, vh)
        ctx = ctx.transpose(0, 2, 1, 3).reshape(B, S, H)
        attn = ctx @ lw["dense_w"] + lw["dense_b"][0]
        attn = ln(attn, lw["ln3_g"], lw["ln3_b"])
        li = h + attn
        x2 = ln(li, lw["ln2_g"], lw["ln2_b"])
        m = x2 @ lw["fc1_w"] + lw["fc1_b"][0]
        m = 0.5 * m * (1.0 + jnp.tanh(0.7978845608028654 * m * (1.0 + 0.044715 * m * m)))
        m = m @ lw["fc2_w"] + lw["fc2_b"][0]
        m = ln(m, lw["ln4_g"], lw["ln4_b"])
        h = li + m

    lf = ln(h, params["final_ln_g"], params["final_ln_b"])
    return lf @ params["word_emb"].T


# ----------------------------- main ----------------------------------------- #

if __name__ == "__main__":
    B, S, H, NUM_HEADS = 2, 16, 64, 4
    VOCAB, MAX_SEQ, NUM_LAYERS = 256, 32, 2
    EPS = 1e-5

    key = jax.random.PRNGKey(0)
    k_ids, k_params = jax.random.split(key)

    input_ids = jax.random.randint(k_ids, (B, S), 0, VOCAB, dtype=jnp.int32)
    position_ids = jnp.tile(jnp.arange(S, dtype=jnp.int32)[None, :], (B, 1))
    # causal mask, shape [1, 1, S, S] as in the PyTorch module
    attention_mask = jnp.tril(jnp.ones((S, S), jnp.float32))[None, None]

    params = init_params(k_params, num_layers=NUM_LAYERS, vocab=VOCAB,
                         hidden=H, max_seq=MAX_SEQ)
    prepared = prepare_params(params, num_heads=NUM_HEADS)

    logits = base_transformer_forward(prepared, input_ids, position_ids, attention_mask,
                                      num_heads=NUM_HEADS, eps=EPS)
    logits = jax.block_until_ready(logits)

    ref = reference_forward(params, input_ids, position_ids, attention_mask,
                            num_heads=NUM_HEADS, eps=EPS)
    assert logits.shape == (B, S, VOCAB)
    assert bool(jnp.all(jnp.isfinite(logits)))
    # bf16 matmuls (fp32 accumulation) introduce small drift vs the fp32 reference.
    assert jnp.allclose(logits, ref, rtol=3e-2, atol=3e-2), \
        f"max abs err {float(jnp.max(jnp.abs(logits - ref)))}"

    print("KERNEL_OK")
</pallas_src>

<mosaic_0001>
module attributes {stable_mosaic.version = 11 : i64} {
  func.func @attention_block_kernel(%arg0: i32, %arg1: memref<1x16x64xf32, #tpu.memory_space<vmem>>, %arg2: memref<16x16xf32, #tpu.memory_space<vmem>>, %arg3: memref<1x64xf32, #tpu.memory_space<vmem>>, %arg4: memref<1x64xf32, #tpu.memory_space<vmem>>, %arg5: memref<64x192xbf16, #tpu.memory_space<vmem>>, %arg6: memref<1x192xf32, #tpu.memory_space<vmem>>, %arg7: memref<64x64xbf16, #tpu.memory_space<vmem>>, %arg8: memref<1x64xf32, #tpu.memory_space<vmem>>, %arg9: memref<1x64xf32, #tpu.memory_space<vmem>>, %arg10: memref<1x64xf32, #tpu.memory_space<vmem>>, %arg11: memref<1x16x64xf32, #tpu.memory_space<vmem>>) attributes {dimension_semantics = [#tpu.dimension_semantics<parallel>], iteration_bounds = array<i64: 2>, scalar_prefetch = 0 : i64, scratch_operands = 0 : i64, tpu.core_type = #tpu.core_type<tc>, window_params = [{transform_indices = @transform_0, window_bounds = array<i64: 1, 16, 64>}, {pipeline_mode = #tpu.pipeline_mode<synchronous>, transform_indices = @transform_1, window_bounds = array<i64: 16, 16>}, {pipeline_mode = #tpu.pipeline_mode<synchronous>, transform_indices = @transform_2, window_bounds = array<i64: 1, 64>}, {pipeline_mode = #tpu.pipeline_mode<synchronous>, transform_indices = @transform_3, window_bounds = array<i64: 1, 64>}, {pipeline_mode = #tpu.pipeline_mode<synchronous>, transform_indices = @transform_4, window_bounds = array<i64: 64, 192>}, {pipeline_mode = #tpu.pipeline_mode<synchronous>, transform_indices = @transform_5, window_bounds = array<i64: 1, 192>}, {pipeline_mode = #tpu.pipeline_mode<synchronous>, transform_indices = @transform_6, window_bounds = array<i64: 64, 64>}, {pipeline_mode = #tpu.pipeline_mode<synchronous>, transform_indices = @transform_7, window_bounds = array<i64: 1, 64>}, {pipeline_mode = #tpu.pipeline_mode<synchronous>, transform_indices = @transform_8, window_bounds = array<i64: 1, 64>}, {pipeline_mode = #tpu.pipeline_mode<synchronous>, transform_indices = @transform_9, window_bounds = array<i64: 1, 64>}, {transform_indices = @transform_10, window_bounds = array<i64: 1, 16, 64>}]} {
    %c0 = arith.constant 0 : index
    %c0_0 = arith.constant 0 : index
    %c0_1 = arith.constant 0 : index
    %0 = vector.load %arg1[%c0, %c0_0, %c0_1] : memref<1x16x64xf32, #tpu.memory_space<vmem>>, vector<1x16x64xf32>
    %1 = vector.shape_cast %0 : vector<1x16x64xf32> to vector<16x64xf32>
    %c0_2 = arith.constant 0 : index
    %c0_3 = arith.constant 0 : index
    %2 = vector.load %arg2[%c0_2, %c0_3] : memref<16x16xf32, #tpu.memory_space<vmem>>, vector<16x16xf32>
    %c0_4 = arith.constant 0 : index
    %c0_5 = arith.constant 0 : index
    %3 = vector.load %arg3[%c0_4, %c0_5] : memref<1x64xf32, #tpu.memory_space<vmem>>, vector<1x64xf32>
    %c0_6 = arith.constant 0 : index
    %c0_7 = arith.constant 0 : index
    %4 = vector.load %arg4[%c0_6, %c0_7] : memref<1x64xf32, #tpu.memory_space<vmem>>, vector<1x64xf32>
    %cst = arith.constant dense<0.000000e+00> : vector<16xf32>
    %5 = vector.multi_reduction <add>, %1, %cst [1] : vector<16x64xf32> to vector<16xf32>
    %6 = vector.shape_cast %5 : vector<16xf32> to vector<16x1xf32>
    %cst_8 = arith.constant 6.400000e+01 : f32
    %7 = vector.broadcast %cst_8 : f32 to vector<16x1xf32>
    %8 = arith.divf %6, %7 : vector<16x1xf32>
    %9 = vector.broadcast %8 : vector<16x1xf32> to vector<16x64xf32>
    %10 = arith.subf %1, %9 : vector<16x64xf32>
    %11 = arith.mulf %10, %10 : vector<16x64xf32>
    %cst_9 = arith.constant dense<0.000000e+00> : vector<16xf32>
    %12 = vector.multi_reduction <add>, %11, %cst_9 [1] : vector<16x64xf32> to vector<16xf32>
    %13 = vector.shape_cast %12 : vector<16xf32> to vector<16x1xf32>
    %cst_10 = arith.constant 6.400000e+01 : f32
    %14 = vector.broadcast %cst_10 : f32 to vector<16x1xf32>
    %15 = arith.divf %13, %14 : vector<16x1xf32>
    %16 = vector.broadcast %8 : vector<16x1xf32> to vector<16x64xf32>
    %17 = arith.subf %1, %16 : vector<16x64xf32>
    %cst_11 = arith.constant 9.99999974E-6 : f32
    %18 = vector.broadcast %cst_11 : f32 to vector<16x1xf32>
    %19 = arith.addf %15, %18 : vector<16x1xf32>
    %20 = math.rsqrt %19 : vector<16x1xf32>
    %21 = vector.broadcast %20 : vector<16x1xf32> to vector<16x64xf32>
    %22 = arith.mulf %17, %21 : vector<16x64xf32>
    %23 = vector.broadcast %3 : vector<1x64xf32> to vector<16x64xf32>
    %24 = arith.mulf %22, %23 : vector<16x64xf32>
    %25 = vector.broadcast %4 : vector<1x64xf32> to vector<16x64xf32>
    %26 = arith.addf %24, %25 : vector<16x64xf32>
    %27 = arith.truncf %26 : vector<16x64xf32> to vector<16x64xbf16>
    %c0_12 = arith.constant 0 : index
    %c0_13 = arith.constant 0 : index
    %28 = vector.load %arg5[%c0_12, %c0_13] : memref<64x192xbf16, #tpu.memory_space<vmem>>, vector<64x192xbf16>
    %cst_14 = arith.constant dense<0.000000e+00> : vector<16x192xf32>
    %29 = tpu.matmul %27, %28, %cst_14 {dimension_numbers = #tpu.dot_dimension_numbers<[1], [0], [0], [1], [0, 0, 1, 1], [], []>} : vector<16x64xbf16>, vector<64x192xbf16>, vector<16x192xf32> -> vector<16x192xf32>
    %c0_15 = arith.constant 0 : index
    %c0_16 = arith.constant 0 : index
    %30 = vector.load %arg6[%c0_15, %c0_16] : memref<1x192xf32, #tpu.memory_space<vmem>>, vector<1x192xf32>
    %31 = vector.broadcast %30 : vector<1x192xf32> to vector<16x192xf32>
    %32 = arith.addf %29, %31 : vector<16x192xf32>
    %33 = vector.extract_strided_slice %32 {offsets = [0, 0], sizes = [16, 16], strides = [1, 1]} : vector<16x192xf32> to vector<16x16xf32>
    %34 = vector.extract_strided_slice %32 {offsets = [0, 16], sizes = [16, 16], strides = [1, 1]} : vector<16x192xf32> to vector<16x16xf32>
    %35 = vector.extract_strided_slice %32 {offsets = [0, 32], sizes = [16, 16], strides = [1, 1]} : vector<16x192xf32> to vector<16x16xf32>
    %36 = vector.extract_strided_slice %32 {offsets = [0, 48], sizes = [16, 16], strides = [1, 1]} : vector<16x192xf32> to vector<16x16xf32>
    %37 = vector.shape_cast %33 : vector<16x16xf32> to vector<1x16x16xf32>
    %38 = vector.shape_cast %34 : vector<16x16xf32> to vector<1x16x16xf32>
    %39 = vector.shape_cast %35 : vector<16x16xf32> to vector<1x16x16xf32>
    %40 = vector.shape_cast %36 : vector<16x16xf32> to vector<1x16x16xf32>
    %41 = tpu.concatenate %37, %38, %39, %40 in 0 : vector<1x16x16xf32>, vector<1x16x16xf32>, vector<1x16x16xf32>, vector<1x16x16xf32> -> vector<4x16x16xf32>
    %42 = arith.truncf %41 : vector<4x16x16xf32> to vector<4x16x16xbf16>
    %43 = vector.extract_strided_slice %32 {offsets = [0, 64], sizes = [16, 16], strides = [1, 1]} : vector<16x192xf32> to vector<16x16xf32>
    %44 = vector.extract_strided_slice %32 {offsets = [0, 80], sizes = [16, 16], strides = [1, 1]} : vector<16x192xf32> to vector<16x16xf32>
    %45 = vector.extract_strided_slice %32 {offsets = [0, 96], sizes = [16, 16], strides = [1, 1]} : vector<16x192xf32> to vector<16x16xf32>
    %46 = vector.extract_strided_slice %32 {offsets = [0, 112], sizes = [16, 16], strides = [1, 1]} : vector<16x192xf32> to vector<16x16xf32>
    %47 = vector.shape_cast %43 : vector<16x16xf32> to vector<1x16x16xf32>
    %48 = vector.shape_cast %44 : vector<16x16xf32> to vector<1x16x16xf32>
    %49 = vector.shape_cast %45 : vector<16x16xf32> to vector<1x16x16xf32>
    %50 = vector.shape_cast %46 : vector<16x16xf32> to vector<1x16x16xf32>
    %51 = tpu.concatenate %47, %48, %49, %50 in 0 : vector<1x16x16xf32>, vector<1x16x16xf32>, vector<1x16x16xf32>, vector<1x16x16xf32> -> vector<4x16x16xf32>
    %52 = arith.truncf %51 : vector<4x16x16xf32> to vector<4x16x16xbf16>
    %53 = vector.extract_strided_slice %32 {offsets = [0, 128], sizes = [16, 16], strides = [1, 1]} : vector<16x192xf32> to vector<16x16xf32>
    %54 = vector.extract_strided_slice %32 {offsets = [0, 144], sizes = [16, 16], strides = [1, 1]} : vector<16x192xf32> to vector<16x16xf32>
    %55 = vector.extract_strided_slice %32 {offsets = [0, 160], sizes = [16, 16], strides = [1, 1]} : vector<16x192xf32> to vector<16x16xf32>
    %56 = vector.extract_strided_slice %32 {offsets = [0, 176], sizes = [16, 16], strides = [1, 1]} : vector<16x192xf32> to vector<16x16xf32>
    %57 = vector.shape_cast %53 : vector<16x16xf32> to vector<1x16x16xf32>
    %58 = vector.shape_cast %54 : vector<16x16xf32> to vector<1x16x16xf32>
    %59 = vector.shape_cast %55 : vector<16x16xf32> to vector<1x16x16xf32>
    %60 = vector.shape_cast %56 : vector<16x16xf32> to vector<1x16x16xf32>
    %61 = tpu.concatenate %57, %58, %59, %60 in 0 : vector<1x16x16xf32>, vector<1x16x16xf32>, vector<1x16x16xf32>, vector<1x16x16xf32> -> vector<4x16x16xf32>
    %62 = arith.truncf %61 : vector<4x16x16xf32> to vector<4x16x16xbf16>
    "tpu.trace_start"() <{level = 10 : i32, message = "hqd,hkd->hqk"}> : () -> ()
    %cst_17 = arith.constant dense<0.000000e+00> : vector<4x16x16xf32>
    %63 = tpu.matmul %42, %52, %cst_17 {dimension_numbers = #tpu.dot_dimension_numbers<[2], [2], [1], [1], [0, 0, 0, 1, 1, 1], [0], [0]>} : vector<4x16x16xbf16>, vector<4x16x16xbf16>, vector<4x16x16xf32> -> vector<4x16x16xf32>
    "tpu.trace_stop"() : () -> ()
    %64 = vector.shape_cast %2 : vector<16x16xf32> to vector<1x16x16xf32>
    %65 = vector.broadcast %64 : vector<1x16x16xf32> to vector<4x16x16xf32>
    %66 = arith.addf %63, %65 : vector<4x16x16xf32>
    %cst_18 = arith.constant dense<0xFF800000> : vector<4x16xf32>
    %67 = vector.multi_reduction <maximumf>, %66, %cst_18 [2] : vector<4x16x16xf32> to vector<4x16xf32>
    %68 = vector.shape_cast %67 : vector<4x16xf32> to vector<4x16x1xf32>
    %69 = vector.broadcast %68 : vector<4x16x1xf32> to vector<4x16x16xf32>
    %70 = arith.subf %66, %69 : vector<4x16x16xf32>
    %71 = math.exp %70 : vector<4x16x16xf32>
    %cst_19 = arith.constant dense<0.000000e+00> : vector<4x16xf32>
    %72 = vector.multi_reduction <add>, %71, %cst_19 [2] : vector<4x16x16xf32> to vector<4x16xf32>
    %73 = vector.shape_cast %72 : vector<4x16xf32> to vector<4x16x1xf32>
    %74 = tpu.reciprocal %73 {approx = true} : vector<4x16x1xf32> -> vector<4x16x1xf32>
    %75 = vector.broadcast %74 : vector<4x16x1xf32> to vector<4x16x16xf32>
    %76 = arith.mulf %71, %75 : vector<4x16x16xf32>
    %77 = arith.truncf %76 : vector<4x16x16xf32> to vector<4x16x16xbf16>
    "tpu.trace_start"() <{level = 10 : i32, message = "hqk,hkd->hqd"}> : () -> ()
    %cst_20 = arith.constant dense<0.000000e+00> : vector<4x16x16xf32>
    %78 = tpu.matmul %77, %62, %cst_20 {dimension_numbers = #tpu.dot_dimension_numbers<[2], [1], [1], [2], [0, 0, 0, 1, 1, 2], [0], [0]>} : vector<4x16x16xbf16>, vector<4x16x16xbf16>, vector<4x16x16xf32> -> vector<4x16x16xf32>
    "tpu.trace_stop"() : () -> ()
    %79 = vector.extract_strided_slice %78 {offsets = [0, 0, 0], sizes = [1, 16, 16], strides = [1, 1, 1]} : vector<4x16x16xf32> to vector<1x16x16xf32>
    %80 = vector.shape_cast %79 : vector<1x16x16xf32> to vector<16x16xf32>
    %81 = vector.extract_strided_slice %78 {offsets = [1, 0, 0], sizes = [1, 16, 16], strides = [1, 1, 1]} : vector<4x16x16xf32> to vector<1x16x16xf32>
    %82 = vector.shape_cast %81 : vector<1x16x16xf32> to vector<16x16xf32>
    %83 = vector.extract_strided_slice %78 {offsets = [2, 0, 0], sizes = [1, 16, 16], strides = [1, 1, 1]} : vector<4x16x16xf32> to vector<1x16x16xf32>
    %84 = vector.shape_cast %83 : vector<1x16x16xf32> to vector<16x16xf32>
    %85 = vector.extract_strided_slice %78 {offsets = [3, 0, 0], sizes = [1, 16, 16], strides = [1, 1, 1]} : vector<4x16x16xf32> to vector<1x16x16xf32>
    %86 = vector.shape_cast %85 : vector<1x16x16xf32> to vector<16x16xf32>
    %87 = tpu.concatenate %80, %82, %84, %86 in 1 : vector<16x16xf32>, vector<16x16xf32>, vector<16x16xf32>, vector<16x16xf32> -> vector<16x64xf32>
    %88 = arith.truncf %87 : vector<16x64xf32> to vector<16x64xbf16>
    %c0_21 = arith.constant 0 : index
    %c0_22 = arith.constant 0 : index
    %89 = vector.load %arg7[%c0_21, %c0_22] : memref<64x64xbf16, #tpu.memory_space<vmem>>, vector<64x64xbf16>
    %cst_23 = arith.constant dense<0.000000e+00> : vector<16x64xf32>
    %90 = tpu.matmul %88, %89, %cst_23 {dimension_numbers = #tpu.dot_dimension_numbers<[1], [0], [0], [1], [0, 0, 1, 1], [], []>} : vector<16x64xbf16>, vector<64x64xbf16>, vector<16x64xf32> -> vector<16x64xf32>
    %c0_24 = arith.constant 0 : index
    %c0_25 = arith.constant 0 : index
    %91 = vector.load %arg8[%c0_24, %c0_25] : memref<1x64xf32, #tpu.memory_space<vmem>>, vector<1x64xf32>
    %92 = vector.broadcast %91 : vector<1x64xf32> to vector<16x64xf32>
    %93 = arith.addf %90, %92 : vector<16x64xf32>
    %c0_26 = arith.constant 0 : index
    %c0_27 = arith.constant 0 : index
    %94 = vector.load %arg9[%c0_26, %c0_27] : memref<1x64xf32, #tpu.memory_space<vmem>>, vector<1x64xf32>
    %c0_28 = arith.constant 0 : index
    %c0_29 = arith.constant 0 : index
    %95 = vector.load %arg10[%c0_28, %c0_29] : memref<1x64xf32, #tpu.memory_space<vmem>>, vector<1x64xf32>
    %cst_30 = arith.constant dense<0.000000e+00> : vector<16xf32>
    %96 = vector.multi_reduction <add>, %93, %cst_30 [1] : vector<16x64xf32> to vector<16xf32>
    %97 = vector.shape_cast %96 : vector<16xf32> to vector<16x1xf32>
    %cst_31 = arith.constant 6.400000e+01 : f32
    %98 = vector.broadcast %cst_31 : f32 to vector<16x1xf32>
    %99 = arith.divf %97, %98 : vector<16x1xf32>
    %100 = vector.broadcast %99 : vector<16x1xf32> to vector<16x64xf32>
    %101 = arith.subf %93, %100 : vector<16x64xf32>
    %102 = arith.mulf %101, %101 : vector<16x64xf32>
    %cst_32 = arith.constant dense<0.000000e+00> : vector<16xf32>
    %103 = vector.multi_reduction <add>, %102, %cst_32 [1] : vector<16x64xf32> to vector<16xf32>
    %104 = vector.shape_cast %103 : vector<16xf32> to vector<16x1xf32>
    %cst_33 = arith.constant 6.400000e+01 : f32
    %105 = vector.broadcast %cst_33 : f32 to vector<16x1xf32>
    %106 = arith.divf %104, %105 : vector<16x1xf32>
    %107 = vector.broadcast %99 : vector<16x1xf32> to vector<16x64xf32>
    %108 = arith.subf %93, %107 : vector<16x64xf32>
    %cst_34 = arith.constant 9.99999974E-6 : f32
    %109 = vector.broadcast %cst_34 : f32 to vector<16x1xf32>
    %110 = arith.addf %106, %109 : vector<16x1xf32>
    %111 = math.rsqrt %110 : vector<16x1xf32>
    %112 = vector.broadcast %111 : vector<16x1xf32> to vector<16x64xf32>
    %113 = arith.mulf %108, %112 : vector<16x64xf32>
    %114 = vector.broadcast %94 : vector<1x64xf32> to vector<16x64xf32>
    %115 = arith.mulf %113, %114 : vector<16x64xf32>
    %116 = vector.broadcast %95 : vector<1x64xf32> to vector<16x64xf32>
    %117 = arith.addf %115, %116 : vector<16x64xf32>
    %118 = arith.addf %1, %117 : vector<16x64xf32>
    %c0_35 = arith.constant 0 : index
    %c0_36 = arith.constant 0 : index
    %c0_37 = arith.constant 0 : index
    %119 = vector.load %arg11[%c0_35, %c0_36, %c0_37] : memref<1x16x64xf32, #tpu.memory_space<vmem>>, vector<1x16x64xf32>
    %120 = vector.shape_cast %119 : vector<1x16x64xf32> to vector<16x64xf32>
    %121 = vector.shape_cast %118 : vector<16x64xf32> to vector<1x16x64xf32>
    tpu.vector_store %arg11[%c0_35, %c0_36, %c0_37], %121 {strides = array<i32>} : memref<1x16x64xf32, #tpu.memory_space<vmem>>, vector<1x16x64xf32>,
    return
  }
  func.func @transform_0(%arg0: i32) -> (i32, i32, i32) {
    %c0_i32 = arith.constant 0 : i32
    %c0_i32_0 = arith.constant 0 : i32
    %c0_i32_1 = arith.constant 0 : i32
    return %arg0, %c0_i32, %c0_i32_0 : i32, i32, i32
  }
  func.func @transform_1(%arg0: i32) -> (i32, i32) {
    %c0_i32 = arith.constant 0 : i32
    %c0_i32_0 = arith.constant 0 : i32
    %c0_i32_1 = arith.constant 0 : i32
    return %c0_i32, %c0_i32_0 : i32, i32
  }
  func.func @transform_2(%arg0: i32) -> (i32, i32) {
    %c0_i32 = arith.constant 0 : i32
    %c0_i32_0 = arith.constant 0 : i32
    %c0_i32_1 = arith.constant 0 : i32
    return %c0_i32, %c0_i32_0 : i32, i32
  }
  func.func @transform_3(%arg0: i32) -> (i32, i32) {
    %c0_i32 = arith.constant 0 : i32
    %c0_i32_0 = arith.constant 0 : i32
    %c0_i32_1 = arith.constant 0 : i32
    return %c0_i32, %c0_i32_0 : i32, i32
  }
  func.func @transform_4(%arg0: i32) -> (i32, i32) {
    %c0_i32 = arith.constant 0 : i32
    %c0_i32_0 = arith.constant 0 : i32
    %c0_i32_1 = arith.constant 0 : i32
    return %c0_i32, %c0_i32_0 : i32, i32
  }
  func.func @transform_5(%arg0: i32) -> (i32, i32) {
    %c0_i32 = arith.constant 0 : i32
    %c0_i32_0 = arith.constant 0 : i32
    %c0_i32_1 = arith.constant 0 : i32
    return %c0_i32, %c0_i32_0 : i32, i32
  }
  func.func @transform_6(%arg0: i32) -> (i32, i32) {
    %c0_i32 = arith.constant 0 : i32
    %c0_i32_0 = arith.constant 0 : i32
    %c0_i32_1 = arith.constant 0 : i32
    return %c0_i32, %c0_i32_0 : i32, i32
  }
  func.func @transform_7(%arg0: i32) -> (i32, i32) {
    %c0_i32 = arith.constant 0 : i32
    %c0_i32_0 = arith.constant 0 : i32
    %c0_i32_1 = arith.constant 0 : i32
    return %c0_i32, %c0_i32_0 : i32, i32
  }
  func.func @transform_8(%arg0: i32) -> (i32, i32) {
    %c0_i32 = arith.constant 0 : i32
    %c0_i32_0 = arith.constant 0 : i32
    %c0_i32_1 = arith.constant 0 : i32
    return %c0_i32, %c0_i32_0 : i32, i32
  }
  func.func @transform_9(%arg0: i32) -> (i32, i32) {
    %c0_i32 = arith.constant 0 : i32
    %c0_i32_0 = arith.constant 0 : i32
    %c0_i32_1 = arith.constant 0 : i32
    return %c0_i32, %c0_i32_0 : i32, i32
  }
  func.func @transform_10(%arg0: i32) -> (i32, i32, i32) {
    %c0_i32 = arith.constant 0 : i32
    %c0_i32_0 = arith.constant 0 : i32
    %c0_i32_1 = arith.constant 0 : i32
    return %arg0, %c0_i32, %c0_i32_0 : i32, i32, i32
  }
}

</mosaic_0001>

<llo_original>
// kernel: tpu_custom_call.1
$region0: #{tpu_custom_call.1}
  #allocation0 [shape = 'u32[]', space=smem, size = 0x4, offset = 0x4, fixed_abs, tag = 'smem constant byte address 0x4 - core index']
  #allocation1 [shape = 'u32[72,128]{1,0:T(1,128)}', space=vmem, size = 0x9000, scoped, tag = 'internal scratch']
  %s0 = inlined_call_operand.hbm [shape: f32[2,16,64], index: 0, kind: input, shape index: {}]
  %s1 = inlined_call_operand.hbm [shape: f32[16,16], index: 1, kind: input, shape index: {}]
  %s2 = inlined_call_operand.vmem [shape: f32[1,64], index: 2, kind: input, shape index: {}]
  %s3 = inlined_call_operand.hbm [shape: f32[1,64], index: 3, kind: input, shape index: {}]
  %s4 = inlined_call_operand.hbm [shape: bf16[64,192], index: 4, kind: input, shape index: {}]
  %s5 = inlined_call_operand.vmem [shape: f32[1,192], index: 5, kind: input, shape index: {}]
  %s6 = inlined_call_operand.hbm [shape: bf16[64,64], index: 6, kind: input, shape index: {}]
  %s7 = inlined_call_operand.vmem [shape: f32[1,64], index: 7, kind: input, shape index: {}]
  %s8 = inlined_call_operand.vmem [shape: f32[1,64], index: 8, kind: input, shape index: {}]
  %s9 = inlined_call_operand.vmem [shape: f32[1,64], index: 9, kind: input, shape index: {}]
  %s10 = inlined_call_operand.hbm [shape: f32[2,16,64], index: 10, kind: output, shape index: {}]
  %s11 = sld [smem:[#allocation0]]
  $region93: #{tpu_custom_call.1} parent=0
    _
  %s13 = ssub.s32 1, %s11
  %s14 = scalar_select 0, %s13, %s11
  $region1: #{tpu_custom_call.1} parent=0
    #allocation2 [shape = 'u8[16384]{0}', space=vmem, size = 0x4000, scoped, tag = 'input window, operand 0']
    #allocation3 [shape = 's32[2]{0}', space=sflag, size = 0x8, scoped, tag = 'scoped memory for tpu_custom_call.1']
    #allocation4 [shape = 's32[2]{0}', space=sflag, size = 0x8, scoped, tag = 'scoped memory for tpu_custom_call.1']
    #allocation5 [shape = 'u8[8192]{0}', space=vmem, size = 0x2000, scoped, tag = 'input window, operand 1, single buffered']
    #allocation6 [shape = 's32[1]{0}', space=sflag, size = 0x4, scoped, tag = 'scoped memory for tpu_custom_call.1']
    #allocation7 [shape = 'u8[512]{0}', space=vmem, size = 0x400, scoped, tag = 'input window, operand 3, single buffered']
    #allocation8 [shape = 'u8[32768]{0}', space=vmem, size = 0x8000, scoped, tag = 'input window, operand 4, single buffered']
    #allocation9 [shape = 's32[1]{0}', space=sflag, size = 0x4, scoped, tag = 'scoped memory for tpu_custom_call.1']
    #allocation10 [shape = 'u8[16384]{0}', space=vmem, size = 0x4000, scoped, tag = 'input window, operand 6, single buffered']
    #allocation11 [shape = 'u8[16384]{0}', space=vmem, size = 0x4000, scoped, tag = 'output window, operand 0']
    %15 = vsyncpa [#allocation3], 0
    %s16 = scalar_lea.sflag [#allocation3], 1
    %17 = vsyncpa %s16, 0
    %18 = vsyncpa [#allocation6], 0
    %19 = vsyncpa [#allocation9], 0
    %20 = vsyncpa [#allocation4], 0
    %s21 = scalar_lea.sflag [#allocation4], 1
    %22 = vsyncpa %s21, 0
    loop: start=0, step=1, limit=4
    $region2: #{tpu_custom_call.1} parent=1 // loop_pre_header
      _
    $region3: #{tpu_custom_call.1} parent=1 // loop_header
      %s24 = sphi 0, %s28
      %p25 = scmp.ge.s32.totalorder %s24, 4
      %s34 = sphi 0, %s36
      %s37 = sphi 0, %s34
      %s38 = sphi 0, %s37
      %s54 = sphi 0, %s38
      %s58 = sphi 0, %s58
      %s60 = sphi 0, %s58
      %s61 = sphi 0, %s60
      %s75 = sphi 0, %s61
      %s79 = sphi 0, %s79
      %s81 = sphi 0, %s79
      %s82 = sphi 0, %s81
      %s96 = sphi 0, %s82
      %s100 = sphi 0, %s100
      %s102 = sphi 0, %s100
      %s103 = sphi 0, %s102
      %s117 = sphi 0, %s103
      %s121 = sphi 0, %s121
      %s123 = sphi 0, %s121
      %s124 = sphi 0, %s123
      %s138 = sphi 0, %s124
      %s142 = sphi 0, %s142
      %s144 = sphi 0, %s142
      %s145 = sphi 0, %s144
      %s159 = sphi 0, %s145
      %s163 = sphi 0, %s163
      %s165 = sphi 0, %s163
      %s166 = sphi 0, %s165
      %s180 = sphi 0, %s166
      %s184 = sphi 0, %s184
      %s186 = sphi 0, %s184
      %s187 = sphi 0, %s186
      %s201 = sphi 0, %s187
      %s205 = sphi 0, %s205
      %s207 = sphi 0, %s205
      %s208 = sphi 0, %s207
      %s222 = sphi 0, %s208
      %s226 = sphi 0, %s226
      %s228 = sphi 0, %s226
      %s229 = sphi 0, %s228
      %s243 = sphi 0, %s229
      %s249 = sphi 0, %s251
      %s252 = sphi 0, %s249
      %s253 = sphi 0, %s252
      %s269 = sphi 0, %s253
    $region4: #{tpu_custom_call.1} parent=1 // loop_header_branch
      %27 = sbr.rel (%p25) target = $region8
    $region5: #{tpu_custom_call.1} parent=1 // loop_body
      %s29 = ssub.s32 %s24, 1
      %s30 = ssub.s32 %s24, 2
      %s31 = sadd.s32 %s24, 1
      %s32 = ssub.s32 %s24, %s31
      %p33 = scmp.eq.s32.totalorder %s32, 0
      %s35 = sadd.s32 %s34, 1
      %s36 = scalar_select %p33, %s34, %s35
      %p39 = pneg %p33
      %p40 = scmp.eq.s32.totalorder %s24, 1
      %p41 = por %p39, %p40
      %p42 = scmp.ne.s32.totalorder %s34, %s37
      %p43 = scmp.eq.s32.totalorder %s24, 0
      %p44 = por %p42, %p43
      %p45 = scmp.ne.s32.totalorder %s34, %s37
      %p46 = scmp.eq.s32.totalorder %s29, 1
      %p47 = por %p45, %p46
      %p48 = scmp.ne.s32.totalorder %s37, %s38
      %p49 = scmp.eq.s32.totalorder %s29, 0
      %p50 = por %p48, %p49
      %p51 = scmp.ne.s32.totalorder %s37, %s38
      %p52 = scmp.eq.s32.totalorder %s30, 1
      %p53 = por %p51, %p52
      %p55 = scmp.ne.s32.totalorder %s38, %s54
      %p56 = scmp.eq.s32.totalorder %s30, 0
      %p57 = por %p55, %p56
      %s59 = sadd.s32 %s58, 1
      %p62 = scmp.eq.s32.totalorder %s24, 1
      %p63 = scmp.ne.s32.totalorder %s58, %s60
      %p64 = scmp.eq.s32.totalorder %s24, 0
      %p65 = por %p63, %p64
      %p66 = scmp.ne.s32.totalorder %s58, %s60
      %p67 = scmp.eq.s32.totalorder %s29, 1
      %p68 = por %p66, %p67
      %p69 = scmp.ne.s32.totalorder %s60, %s61
      %p70 = scmp.eq.s32.totalorder %s29, 0
      %p71 = por %p69, %p70
      %p72 = scmp.ne.s32.totalorder %s60, %s61
      %p73 = scmp.eq.s32.totalorder %s30, 1
      %p74 = por %p72, %p73
      %p76 = scmp.ne.s32.totalorder %s61, %s75
      %p77 = scmp.eq.s32.totalorder %s30, 0
      %p78 = por %p76, %p77
      %s80 = sadd.s32 %s79, 1
      %p83 = scmp.eq.s32.totalorder %s24, 1
      %p84 = scmp.ne.s32.totalorder %s79, %s81
      %p85 = scmp.eq.s32.totalorder %s24, 0
      %p86 = por %p84, %p85
      %p87 = scmp.ne.s32.totalorder %s79, %s81
      %p88 = scmp.eq.s32.totalorder %s29, 1
      %p89 = por %p87, %p88
      %p90 = scmp.ne.s32.totalorder %s81, %s82
      %p91 = scmp.eq.s32.totalorder %s29, 0
      %p92 = por %p90, %p91
      %p93 = scmp.ne.s32.totalorder %s81, %s82
      %p94 = scmp.eq.s32.totalorder %s30, 1
      %p95 = por %p93, %p94
      %p97 = scmp.ne.s32.totalorder %s82, %s96
      %p98 = scmp.eq.s32.totalorder %s30, 0
      %p99 = por %p97, %p98
      %s101 = sadd.s32 %s100, 1
      %p104 = scmp.eq.s32.totalorder %s24, 1
      %p105 = scmp.ne.s32.totalorder %s100, %s102
      %p106 = scmp.eq.s32.totalorder %s24, 0
      %p107 = por %p105, %p106
      %p108 = scmp.ne.s32.totalorder %s100, %s102
      %p109 = scmp.eq.s32.totalorder %s29, 1
      %p110 = por %p108, %p109
      %p111 = scmp.ne.s32.totalorder %s102, %s103
      %p112 = scmp.eq.s32.totalorder %s29, 0
      %p113 = por %p111, %p112
      %p114 = scmp.ne.s32.totalorder %s102, %s103
      %p115 = scmp.eq.s32.totalorder %s30, 1
      %p116 = por %p114, %p115
      %p118 = scmp.ne.s32.totalorder %s103, %s117
      %p119 = scmp.eq.s32.totalorder %s30, 0
      %p120 = por %p118, %p119
      %s122 = sadd.s32 %s121, 1
      %p125 = scmp.eq.s32.totalorder %s24, 1
      %p126 = scmp.ne.s32.totalorder %s121, %s123
      %p127 = scmp.eq.s32.totalorder %s24, 0
      %p128 = por %p126, %p127
      %p129 = scmp.ne.s32.totalorder %s121, %s123
      %p130 = scmp.eq.s32.totalorder %s29, 1
      %p131 = por %p129, %p130
      %p132 = scmp.ne.s32.totalorder %s123, %s124
      %p133 = scmp.eq.s32.totalorder %s29, 0
      %p134 = por %p132, %p133
      %p135 = scmp.ne.s32.totalorder %s123, %s124
      %p136 = scmp.eq.s32.totalorder %s30, 1
      %p137 = por %p135, %p136
      %p139 = scmp.ne.s32.totalorder %s124, %s138
      %p140 = scmp.eq.s32.totalorder %s30, 0
      %p141 = por %p139, %p140
      %s143 = sadd.s32 %s142, 1
      %p146 = scmp.eq.s32.totalorder %s24, 1
      %p147 = scmp.ne.s32.totalorder %s142, %s144
      %p148 = scmp.eq.s32.totalorder %s24, 0
      %p149 = por %p147, %p148
      %p150 = scmp.ne.s32.totalorder %s142, %s144
      %p151 = scmp.eq.s32.totalorder %s29, 1
      %p152 = por %p150, %p151
      %p153 = scmp.ne.s32.totalorder %s144, %s145
      %p154 = scmp.eq.s32.totalorder %s29, 0
      %p155 = por %p153, %p154
      %p156 = scmp.ne.s32.totalorder %s144, %s145
      %p157 = scmp.eq.s32.totalorder %s30, 1
      %p158 = por %p156, %p157
      %p160 = scmp.ne.s32.totalorder %s145, %s159
      %p161 = scmp.eq.s32.totalorder %s30, 0
      %p162 = por %p160, %p161
      %s164 = sadd.s32 %s163, 1
      %p167 = scmp.eq.s32.totalorder %s24, 1
      %p168 = scmp.ne.s32.totalorder %s163, %s165
      %p169 = scmp.eq.s32.totalorder %s24, 0
      %p170 = por %p168, %p169
      %p171 = scmp.ne.s32.totalorder %s163, %s165
      %p172 = scmp.eq.s32.totalorder %s29, 1
      %p173 = por %p171, %p172
      %p174 = scmp.ne.s32.totalorder %s165, %s166
      %p175 = scmp.eq.s32.totalorder %s29, 0
      %p176 = por %p174, %p175
      %p177 = scmp.ne.s32.totalorder %s165, %s166
      %p178 = scmp.eq.s32.totalorder %s30, 1
      %p179 = por %p177, %p178
      %p181 = scmp.ne.s32.totalorder %s166, %s180
      %p182 = scmp.eq.s32.totalorder %s30, 0
      %p183 = por %p181, %p182
      %s185 = sadd.s32 %s184, 1
      %p188 = scmp.eq.s32.totalorder %s24, 1
      %p189 = scmp.ne.s32.totalorder %s184, %s186
      %p190 = scmp.eq.s32.totalorder %s24, 0
      %p191 = por %p189, %p190
      %p192 = scmp.ne.s32.totalorder %s184, %s186
      %p193 = scmp.eq.s32.totalorder %s29, 1
      %p194 = por %p192, %p193
      %p195 = scmp.ne.s32.totalorder %s186, %s187
      %p196 = scmp.eq.s32.totalorder %s29, 0
      %p197 = por %p195, %p196
      %p198 = scmp.ne.s32.totalorder %s186, %s187
      %p199 = scmp.eq.s32.totalorder %s30, 1
      %p200 = por %p198, %p199
      %p202 = scmp.ne.s32.totalorder %s187, %s201
      %p203 = scmp.eq.s32.totalorder %s30, 0
      %p204 = por %p202, %p203
      %s206 = sadd.s32 %s205, 1
      %p209 = scmp.eq.s32.totalorder %s24, 1
      %p210 = scmp.ne.s32.totalorder %s205, %s207
      %p211 = scmp.eq.s32.totalorder %s24, 0
      %p212 = por %p210, %p211
      %p213 = scmp.ne.s32.totalorder %s205, %s207
      %p214 = scmp.eq.s32.totalorder %s29, 1
      %p215 = por %p213, %p214
      %p216 = scmp.ne.s32.totalorder %s207, %s208
      %p217 = scmp.eq.s32.totalorder %s29, 0
      %p218 = por %p216, %p217
      %p219 = scmp.ne.s32.totalorder %s207, %s208
      %p220 = scmp.eq.s32.totalorder %s30, 1
      %p221 = por %p219, %p220
      %p223 = scmp.ne.s32.totalorder %s208, %s222
      %p224 = scmp.eq.s32.totalorder %s30, 0
      %p225 = por %p223, %p224
      %s227 = sadd.s32 %s226, 1
      %p230 = scmp.eq.s32.totalorder %s24, 1
      %p231 = scmp.ne.s32.totalorder %s226, %s228
      %p232 = scmp.eq.s32.totalorder %s24, 0
      %p233 = por %p231, %p232
      %p234 = scmp.ne.s32.totalorder %s226, %s228
      %p235 = scmp.eq.s32.totalorder %s29, 1
      %p236 = por %p234, %p235
      %p237 = scmp.ne.s32.totalorder %s228, %s229
      %p238 = scmp.eq.s32.totalorder %s29, 0
      %p239 = por %p237, %p238
      %p240 = scmp.ne.s32.totalorder %s228, %s229
      %p241 = scmp.eq.s32.totalorder %s30, 1
      %p242 = por %p240, %p241
      %p244 = scmp.ne.s32.totalorder %s229, %s243
      %p245 = scmp.eq.s32.totalorder %s30, 0
      %p246 = por %p244, %p245
      %s247 = ssub.s32 %s24, %s31
      %p248 = scmp.eq.s32.totalorder %s247, 0
      %s250 = sadd.s32 %s249, 1
      %s251 = scalar_select %p248, %s249, %s250
      %p254 = pneg %p248
      %p255 = scmp.eq.s32.totalorder %s24, 1
      %p256 = por %p254, %p255
      %p257 = scmp.ne.s32.totalorder %s249, %s252
      %p258 = scmp.eq.s32.totalorder %s24, 0
      %p259 = por %p257, %p258
      %p260 = scmp.ne.s32.totalorder %s249, %s252
      %p261 = scmp.eq.s32.totalorder %s29, 1
      %p262 = por %p260, %p261
      %p263 = scmp.ne.s32.totalorder %s252, %s253
      %p264 = scmp.eq.s32.totalorder %s29, 0
      %p265 = por %p263, %p264
      %p266 = scmp.ne.s32.totalorder %s252, %s253
      %p267 = scmp.eq.s32.totalorder %s30, 1
      %p268 = por %p266, %p267
      %p270 = scmp.ne.s32.totalorder %s253, %s269
      %p271 = scmp.eq.s32.totalorder %s30, 0
      %p272 = por %p270, %p271
      %p273 = scmp.le.s32.totalorder 1, %s24
      %p274 = scmp.lt.s32.totalorder %s24, 3
      %p275 = pnand %p273, %p274
      %p276 = pneg %p275
      // Predicated region
      $region9: #{tpu_custom_call.1} parent=5 // pred_check
        _
      $region10: #{tpu_custom_call.1} parent=5 // pred_check_branch
        %278 = sbr.rel (%p275) target = $region12
      $region11: #{tpu_custom_call.1} parent=5 // pred_region
        %s279 = ssub.s32 %s24, 1
        // Predicated region
        $region13: #{tpu_custom_call.1} parent=11 // pred_check
          %p280 = pneg %p71
        $region14: #{tpu_custom_call.1} parent=11 // pred_check_branch
          %282 = sbr.rel (%p280) target = $region16
        $region15: #{tpu_custom_call.1} parent=11 // pred_region
          %284 = vsyncadd [#allocation6], 0
          %s285 = sshll.u32 %s1, 4
          %s286 = int_to_ptr.hbm [resolvable:$true] %s285
          %s287 = sshll.u32 [#allocation5], 4
          %s288 = int_to_ptr.vmem [resolvable:$true] %s287
          %293 = dma.hbm_to_vmem [thread:$0]  %s286, 256, %s288, [#allocation6], 128, 128, 8
        $region16: #{tpu_custom_call.1} parent=11 // pred_fallthru
          _
        // Predicated region
        $region17: #{tpu_custom_call.1} parent=11 // pred_check
          %p294 = pneg %p92
        $region18: #{tpu_custom_call.1} parent=11 // pred_check_branch
          %296 = sbr.rel (%p294) target = $region20
        $region19: #{tpu_custom_call.1} parent=11 // pred_region
          _
        $region20: #{tpu_custom_call.1} parent=11 // pred_fallthru
          _
        // Predicated region
        $region21: #{tpu_custom_call.1} parent=11 // pred_check
          %p297 = pneg %p113
        $region22: #{tpu_custom_call.1} parent=11 // pred_check_branch
          %299 = sbr.rel (%p297) target = $region24
        $region23: #{tpu_custom_call.1} parent=11 // pred_region
          %301 = vsyncadd [#allocation6], 0
          %s303 = sshll.u32 %s3, 4
          %s304 = int_to_ptr.hbm [resolvable:$true] %s303
          %s305 = sshll.u32 [#allocation7], 4
          %s306 = int_to_ptr.vmem [resolvable:$true] %s305
          %308 = dma.hbm_to_vmem [thread:$0]  %s304, 16, %s306, [#allocation6]
        $region24: #{tpu_custom_call.1} parent=11 // pred_fallthru
          _
        // Predicated region
        $region25: #{tpu_custom_call.1} parent=11 // pred_check
          %p309 = pneg %p134
        $region26: #{tpu_custom_call.1} parent=11 // pred_check_branch
          %311 = sbr.rel (%p309) target = $region28
        $region27: #{tpu_custom_call.1} parent=11 // pred_region
          %313 = vsyncadd [#allocation9], 0
          %s314 = sshll.u32 %s4, 4
          %s315 = int_to_ptr.hbm [resolvable:$true] %s314
          %s316 = sshll.u32 [#allocation8], 4
          %s317 = int_to_ptr.vmem [resolvable:$true] %s316
          %322 = dma.hbm_to_vmem [thread:$0]  %s315, 1024, %s317, [#allocation9], 128, 128, 8
        $region28: #{tpu_custom_call.1} parent=11 // pred_fallthru
          _
        // Predicated region
        $region29: #{tpu_custom_call.1} parent=11 // pred_check
          %p323 = pneg %p155
        $region30: #{tpu_custom_call.1} parent=11 // pred_check_branch
          %325 = sbr.rel (%p323) target = $region32
        $region31: #{tpu_custom_call.1} parent=11 // pred_region
          _
        $region32: #{tpu_custom_call.1} parent=11 // pred_fallthru
          _
        // Predicated region
        $region33: #{tpu_custom_call.1} parent=11 // pred_check
          %p326 = pneg %p176
        $region34: #{tpu_custom_call.1} parent=11 // pred_check_branch
          %328 = sbr.rel (%p326) target = $region36
        $region35: #{tpu_custom_call.1} parent=11 // pred_region
          %330 = vsyncadd [#allocation9], 0
          %s331 = sshll.u32 %s6, 4
          %s332 = int_to_ptr.hbm [resolvable:$true] %s331
          %s333 = sshll.u32 [#allocation10], 4
          %s334 = int_to_ptr.vmem [resolvable:$true] %s333
          %339 = dma.hbm_to_vmem [thread:$0]  %s332, 512, %s334, [#allocation9], 64, 64, 4
        $region36: #{tpu_custom_call.1} parent=11 // pred_fallthru
          _
        // Predicated region
        $region37: #{tpu_custom_call.1} parent=11 // pred_check
          %p340 = pneg %p197
        $region38: #{tpu_custom_call.1} parent=11 // pred_check_branch
          %342 = sbr.rel (%p340) target = $region40
        $region39: #{tpu_custom_call.1} parent=11 // pred_region
          _
        $region40: #{tpu_custom_call.1} parent=11 // pred_fallthru
          _
        // Predicated region
        $region41: #{tpu_custom_call.1} parent=11 // pred_check
          %p343 = pneg %p218
        $region42: #{tpu_custom_call.1} parent=11 // pred_check_branch
          %345 = sbr.rel (%p343) target = $region44
        $region43: #{tpu_custom_call.1} parent=11 // pred_region
          _
        $region44: #{tpu_custom_call.1} parent=11 // pred_fallthru
          _
        // Predicated region
        $region45: #{tpu_custom_call.1} parent=11 // pred_check
          %p346 = pneg %p239
        $region46: #{tpu_custom_call.1} parent=11 // pred_check_branch
          %348 = sbr.rel (%p346) target = $region48
        $region47: #{tpu_custom_call.1} parent=11 // pred_region
          _
        $region48: #{tpu_custom_call.1} parent=11 // pred_fallthru
          _
      $region12: #{tpu_custom_call.1} parent=5 // pred_fallthru
        _
      %p349 = scmp.lt.s32.totalorder %s24, 2
      // Predicated region
      $region49: #{tpu_custom_call.1} parent=5 // pred_check
        %p350 = pneg %p349
      $region50: #{tpu_custom_call.1} parent=5 // pred_check_branch
        %352 = sbr.rel (%p350) target = $region52
      $region51: #{tpu_custom_call.1} parent=5 // pred_region
        // Predicated region
        $region53: #{tpu_custom_call.1} parent=51 // pred_check
          %p353 = pneg %p44
        $region54: #{tpu_custom_call.1} parent=51 // pred_check_branch
          %355 = sbr.rel (%p353) target = $region56
        $region55: #{tpu_custom_call.1} parent=51 // pred_region
          %s356 = sand.u32 %s34, 1
          %s357 = scalar_lea.sflag [#allocation3], %s356
          %s358 = sand.u32 %s34, 1
          %s359 = smul.addr %s358, 16
          %s360 = scalar_lea.vmem [#allocation2], %s359
          %362 = vsyncadd %s357, 0
          %s363 = smul.addr %s24, 2
          %s364 = smul.addr %s363, 8
          %s365 = scalar_lea.hbm %s0, %s364
          %s366 = sshll.u32 %s365, 4
          %s367 = int_to_ptr.hbm [resolvable:$true] %s366
          %s368 = sshll.u32 %s360, 4
          %s369 = int_to_ptr.vmem [resolvable:$true] %s368
          %374 = dma.hbm_to_vmem [thread:$0]  %s367, 256, %s369, %s357, 128, 128, 8
        $region56: #{tpu_custom_call.1} parent=51 // pred_fallthru
          _
      $region52: #{tpu_custom_call.1} parent=5 // pred_fallthru
        _
      %p375 = scmp.le.s32.totalorder 1, %s24
      %p376 = scmp.lt.s32.totalorder %s24, 3
      %p377 = pnand %p375, %p376
      %p378 = pneg %p377
      // Predicated region
      $region57: #{tpu_custom_call.1} parent=5 // pred_check
        _
      $region58: #{tpu_custom_call.1} parent=5 // pred_check_branch
        %380 = sbr.rel (%p377) target = $region60
      $region59: #{tpu_custom_call.1} parent=5 // pred_region
        %s381 = ssub.s32 %s24, 1
        %s382 = sand.u32 %s37, 1
        %s383 = scalar_lea.sflag [#allocation3], %s382
        %s384 = sand.u32 %s37, 1
        %s385 = smul.addr %s384, 16
        %s386 = scalar_lea.vmem [#allocation2], %s385
        // Predicated region
        $region61: #{tpu_custom_call.1} parent=59 // pred_check
          %p387 = pneg %p50
        $region62: #{tpu_custom_call.1} parent=59 // pred_check_branch
          %389 = sbr.rel (%p387) target = $region64
        $region63: #{tpu_custom_call.1} parent=59 // pred_region
          %391 = dma.done %s383, 256
        $region64: #{tpu_custom_call.1} parent=59 // pred_fallthru
          _
        // Predicated region
        $region65: #{tpu_custom_call.1} parent=59 // pred_check
          %p392 = pneg %p71
        $region66: #{tpu_custom_call.1} parent=59 // pred_check_branch
          %394 = sbr.rel (%p392) target = $region68
        $region67: #{tpu_custom_call.1} parent=59 // pred_region
          %396 = dma.done [#allocation6], 256
        $region68: #{tpu_custom_call.1} parent=59 // pred_fallthru
          _
        // Predicated region
        $region69: #{tpu_custom_call.1} parent=59 // pred_check
          %p397 = pneg %p113
        $region70: #{tpu_custom_call.1} parent=59 // pred_check_branch
          %399 = sbr.rel (%p397) target = $region72
        $region71: #{tpu_custom_call.1} parent=59 // pred_region
          %401 = dma.done [#allocation6], 16
        $region72: #{tpu_custom_call.1} parent=59 // pred_fallthru
          _
        // Predicated region
        $region73: #{tpu_custom_call.1} parent=59 // pred_check
          %p402 = pneg %p134
        $region74: #{tpu_custom_call.1} parent=59 // pred_check_branch
          %404 = sbr.rel (%p402) target = $region76
        $region75: #{tpu_custom_call.1} parent=59 // pred_region
          %406 = dma.done [#allocation9], 1024
        $region76: #{tpu_custom_call.1} parent=59 // pred_fallthru
          _
        // Predicated region
        $region77: #{tpu_custom_call.1} parent=59 // pred_check
          %p407 = pneg %p176
        $region78: #{tpu_custom_call.1} parent=59 // pred_check_branch
          %409 = sbr.rel (%p407) target = $region80
        $region79: #{tpu_custom_call.1} parent=59 // pred_region
          %411 = dma.done [#allocation9], 512
        $region80: #{tpu_custom_call.1} parent=59 // pred_fallthru
          _
        %s412 = sand.u32 %s37, 1
        %s413 = scalar_lea.sflag [#allocation3], %s412
        %s414 = sand.u32 %s37, 1
        %s415 = smul.addr %s414, 16
        %s416 = scalar_lea.vmem [#allocation2], %s415
        %p417 = pneg %p50
        %p418 = pneg %p47
        %p419 = pneg %p71
        %p420 = pneg %p68
        %p421 = pneg %p92
        %p422 = pneg %p89
        %p423 = pneg %p113
        %p424 = pneg %p110
        %p425 = pneg %p134
        %p426 = pneg %p131
        %p427 = pneg %p155
        %p428 = pneg %p152
        %p429 = pneg %p176
        %p430 = pneg %p173
        %p431 = pneg %p197
        %p432 = pneg %p194
        %p433 = pneg %p218
        %p434 = pneg %p215
        %p435 = pneg %p239
        %p436 = pneg %p236
        %p437 = pneg %p265
        %p438 = pneg %p262
        %s439 = sand.u32 %s252, 1
        %s440 = scalar_lea.sflag [#allocation4], %s439
        %s441 = sand.u32 %s252, 1
        %s442 = smul.addr %s441, 16
        %s443 = scalar_lea.vmem [#allocation11], %s442
        %v445 = vld [vmem:[%s386] sm:$0xff]
        %v446 = vld [vmem:[%s386 + $0x8] sm:$0xff]
        %v447 = vld [vmem:[#allocation5] sm:$0xff]
        %v448 = vld [vmem:[#allocation5 + $0x8] sm:$0xff]
        %v449 = vld [vmem:[%s2] sm:$0x1]
        %v450 = vld [vmem:[#allocation7] sm:$0x1]
        %vm451 = vcmask 523264
        %v452 = vsel %vm451, %v445, 0.0
        %453 = vadd.xlane.f32.xlu0 %v452
        %v454 = vpop.xlane.xlu0 %453
        %v455 = vsel %vm451, %v446, 0.0
        %456 = vadd.xlane.f32.xlu0 %v455
        %v457 = vpop.xlane.xlu0 %456
        %v458 = vrcp.pop 64.0
        %v459 = vmul.f32 64.0, %v458
        %v460 = vsub.f32 1.0, %v459
        %v461 = vmul.f32 %v458, %v460
        %v462 = vadd.f32 %v458, %v461
        %vm463 = vweird.f32 %v458
        %v464 = vsel %vm463, %v458, %v462
        %v465 = vmul.f32 %v454, %v464
        %v466 = vmul.f32 %v457, %v464
        %v467 = vsub.f32 %v445, %v465
        %v468 = vsub.f32 %v446, %v466
        %v469 = vmul.f32 %v467, %v467
        %v470 = vmul.f32 %v468, %v468
        %v471 = vsel %vm451, %v469, 0.0
        %472 = vadd.xlane.f32.xlu0 %v471
        %v473 = vpop.xlane.xlu0 %472
        %v474 = vsel %vm451, %v470, 0.0
        %475 = vadd.xlane.f32.xlu0 %v474
        %v476 = vpop.xlane.xlu0 %475
        %v477 = vmul.f32 %v473, %v464
        %v478 = vmul.f32 %v476, %v464
        %v479 = vadd.f32 %v477, 1e-05
        %v480 = vadd.f32 %v478, 1e-05
        %v481 = vrsqrt.pop %v479
        %v482 = vmul.f32 %v481, %v479
        %v483 = vmul.f32 %v482, %v481
        %v484 = vmul.f32 0.5, %v483
        %v485 = vsub.f32 1.5, %v484
        %v486 = vmul.f32 %v481, %v485
        %vm487 = vweird.f32 %v479
        %vm488 = vweird.f32 %v481
        %vm489 = vmor %vm487, %vm488
        %v490 = vsel %vm489, %v481, %v486
        %v491 = vrsqrt.pop %v480
        %v492 = vmul.f32 %v491, %v480
        %v493 = vmul.f32 %v492, %v491
        %v494 = vmul.f32 0.5, %v493
        %v495 = vsub.f32 1.5, %v494
        %v496 = vmul.f32 %v491, %v495
        %vm497 = vweird.f32 %v480
        %vm498 = vweird.f32 %v491
        %vm499 = vmor %vm497, %vm498
        %v500 = vsel %vm499, %v491, %v496
        %v501 = vmul.f32 %v467, %v490
        %v502 = vmul.f32 %v468, %v500
        %v504 = vperm.slane %v449, 0
        %v506 = vmul.f32 %v501, %v504
        %v507 = vmul.f32 %v502, %v504
        %v509 = vperm.slane %v450, 0
        %v511 = vadd.f32 %v506, %v509
        %v512 = vadd.f32 %v507, %v509
        %v513 = vpack.c.bf16 %v512, %v511
        %v514 = vld [vmem:[#allocation8] sm:$0xff]
        %v515 = vld [vmem:[#allocation8 + $0x8] sm:$0xff]
        %v516 = vld [vmem:[#allocation8 + $0x10] sm:$0xff]
        %v517 = vld [vmem:[#allocation8 + $0x18] sm:$0xff]
        %v518 = vld [vmem:[#allocation8 + $0x20] sm:$0xff]
        %v519 = vld [vmem:[#allocation8 + $0x28] sm:$0xff]
        %v520 = vld [vmem:[#allocation8 + $0x30] sm:$0xff]
        %v521 = vld [vmem:[#allocation8 + $0x38] sm:$0xff]
        %v522 = vld [vmem:[%s5] sm:$0x3]
        %v524 = vperm.slane %v522, 0
        %v525 = vperm.slane %v522, 1
        %v536 = vunpack.c.l.b16 %v514
        %v537 = vunpack.c.h.b16 %v514
        %v538 = vunpack.c.l.b16 %v515
        %v539 = vunpack.c.h.b16 %v515
        %v540 = vunpack.c.l.b16 %v516
        %v541 = vunpack.c.h.b16 %v516
        %v542 = vunpack.c.l.b16 %v517
        %v543 = vunpack.c.h.b16 %v517
        %v544 = vunpack.c.l.b16 %v518
        %v545 = vunpack.c.h.b16 %v518
        %v546 = vunpack.c.l.b16 %v519
        %v547 = vunpack.c.h.b16 %v519
        %v548 = vunpack.c.l.b16 %v520
        %v549 = vunpack.c.h.b16 %v520
        %v550 = vunpack.c.l.b16 %v521
        %v551 = vunpack.c.h.b16 %v521
        %v552 = vpack.c.b16 %v538, %v536
        %v553 = vpack.c.b16 %v539, %v537
        %v554 = vpack.c.b16 %v542, %v540
        %v555 = vpack.c.b16 %v543, %v541
        %v556 = vpack.c.b16 %v546, %v544
        %v557 = vpack.c.b16 %v547, %v545
        %v558 = vpack.c.b16 %v550, %v548
        %v559 = vpack.c.b16 %v551, %v549
        %v569 = vsel %vm451, %v513, 0
        %571 = vmatpush.bf16.msra.mxu0 0
        %572 = vmatpush.bf16.msra.mxu0 0
        %573 = vmatpush.bf16.msra.mxu0 0
        %574 = vmatpush.bf16.msra.mxu0 0
        %575 = vmatpush.bf16.msra.mxu0 %v558
        %576 = vmatpush.bf16.msra.mxu0 %v556
        %577 = vmatpush.bf16.msra.mxu0 %v554
        %578 = vmatpush.bf16.msra.mxu0 %v552
        %579 = vmatmul.bf16.gmra.mxu0 %v569
        %v580 = vpop.f32.mrf.mxu0
        %v581 = vadd.f32 %v524, %v580
        %v582 = vpop.f32.mrf.mxu0
        %v583 = vadd.f32 %v524, %v582
        %584 = vdwg.mxu0
        %585 = vmatpush.bf16.msra.mxu0 0
        %586 = vmatpush.bf16.msra.mxu0 0
        %587 = vmatpush.bf16.msra.mxu0 0
        %588 = vmatpush.bf16.msra.mxu0 0
        %589 = vmatpush.bf16.msra.mxu0 %v559
        %590 = vmatpush.bf16.msra.mxu0 %v557
        %591 = vmatpush.bf16.msra.mxu0 %v555
        %592 = vmatpush.bf16.msra.mxu0 %v553
        %593 = vmatmul.bf16.gmra.mxu0 %v569
        %v594 = vpop.f32.mrf.mxu0
        %v595 = vadd.f32 %v525, %v594
        %v596 = vpop.f32.mrf.mxu0
        %v597 = vadd.f32 %v525, %v596
        %598 = vdwg.mxu0
        %601 = vrot.lane.b32.xlu0 %v581, 112
        %v602 = vpop.permute.xlu0 %601
        %603 = vrot.lane.b32.xlu0 %v583, 112
        %v604 = vpop.permute.xlu0 %603
        %607 = vrot.lane.b32.xlu0 %v581, 96
        %v608 = vpop.permute.xlu0 %607
        %609 = vrot.lane.b32.xlu0 %v583, 96
        %v610 = vpop.permute.xlu0 %609
        %613 = vrot.lane.b32.xlu0 %v581, 80
        %v614 = vpop.permute.xlu0 %613
        %615 = vrot.lane.b32.xlu0 %v583, 80
        %v616 = vpop.permute.xlu0 %615
        %v619 = vpack.c.bf16 %v581, %v581
        %v620 = vpack.c.bf16 %v583, %v583
        %v621 = vpack.c.bf16 %v602, %v602
        %v622 = vpack.c.bf16 %v604, %v604
        %v623 = vpack.c.bf16 %v608, %v608
        %v624 = vpack.c.bf16 %v610, %v610
        %v625 = vpack.c.bf16 %v614, %v614
        %v626 = vpack.c.bf16 %v616, %v616
        %629 = vrot.lane.b32.xlu0 %v595, 112
        %v630 = vpop.permute.xlu0 %629
        %631 = vrot.lane.b32.xlu0 %v597, 112
        %v632 = vpop.permute.xlu0 %631
        %635 = vrot.lane.b32.xlu0 %v595, 96
        %v636 = vpop.permute.xlu0 %635
        %637 = vrot.lane.b32.xlu0 %v597, 96
        %v638 = vpop.permute.xlu0 %637
        %641 = vrot.lane.b32.xlu0 %v595, 80
        %v642 = vpop.permute.xlu0 %641
        %643 = vrot.lane.b32.xlu0 %v597, 80
        %v644 = vpop.permute.xlu0 %643
        %v647 = vpack.c.bf16 %v595, %v595
        %v648 = vpack.c.bf16 %v597, %v597
        %v649 = vpack.c.bf16 %v630, %v630
        %v650 = vpack.c.bf16 %v632, %v632
        %v651 = vpack.c.bf16 %v636, %v636
        %v652 = vpack.c.bf16 %v638, %v638
        %v653 = vpack.c.bf16 %v642, %v642
        %v654 = vpack.c.bf16 %v644, %v644
        %v657 = vunpack.c.l.b16 %v619
        %v658 = vunpack.c.l.b16 %v620
        %v659 = vpack.c.b16 %v658, %v657
        %660 = vrot.lane.b32.xlu0 %v659, 64
        %v661 = vpop.permute.xlu0 %660
        %vm662 = vcmask 130048
        %v664 = vsel %vm662, %v659, 0
        %v667 = vsel %vm662, %v661, 0
        %669 = vmatpush.bf16.xpose.msra.mxu0 0
        %670 = vmatpush.bf16.xpose.msra.mxu0 0
        %671 = vmatpush.bf16.xpose.msra.mxu0 0
        %672 = vmatpush.bf16.xpose.msra.mxu0 0
        %673 = vmatpush.bf16.xpose.msra.mxu0 0
        %674 = vmatpush.bf16.xpose.msra.mxu0 0
        %675 = vmatpush.bf16.xpose.msra.mxu0 0
        %676 = vmatpush.bf16.xpose.msra.mxu0 %v667
        %677 = vmatmul.bf16.gmra.mxu0 %v664
        %v678 = vpop.f32.mrf.mxu0
        %v679 = vadd.f32 %v447, %v678
        %v680 = vpop.f32.mrf.mxu0
        %v681 = vadd.f32 %v448, %v680
        %682 = vdwg.mxu0
        %v685 = vunpack.c.l.b16 %v621
        %v686 = vunpack.c.l.b16 %v622
        %v687 = vpack.c.b16 %v686, %v685
        %688 = vrot.lane.b32.xlu0 %v687, 64
        %v689 = vpop.permute.xlu0 %688
        %v691 = vsel %vm662, %v687, 0
        %v694 = vsel %vm662, %v689, 0
        %696 = vmatpush.bf16.xpose.msra.mxu0 0
        %697 = vmatpush.bf16.xpose.msra.mxu0 0
        %698 = vmatpush.bf16.xpose.msra.mxu0 0
        %699 = vmatpush.bf16.xpose.msra.mxu0 0
        %700 = vmatpush.bf16.xpose.msra.mxu0 0
        %701 = vmatpush.bf16.xpose.msra.mxu0 0
        %702 = vmatpush.bf16.xpose.msra.mxu0 0
        %703 = vmatpush.bf16.xpose.msra.mxu0 %v694
        %704 = vmatmul.bf16.gmra.mxu0 %v691
        %v705 = vpop.f32.mrf.mxu0
        %v706 = vadd.f32 %v447, %v705
        %v707 = vpop.f32.mrf.mxu0
        %v708 = vadd.f32 %v448, %v707
        %709 = vdwg.mxu0
        %v712 = vunpack.c.l.b16 %v623
        %v713 = vunpack.c.l.b16 %v624
        %v714 = vpack.c.b16 %v713, %v712
        %715 = vrot.lane.b32.xlu0 %v714, 64
        %v716 = vpop.permute.xlu0 %715
        %v718 = vsel %vm662, %v714, 0
        %v721 = vsel %vm662, %v716, 0
        %723 = vmatpush.bf16.xpose.msra.mxu0 0
        %724 = vmatpush.bf16.xpose.msra.mxu0 0
        %725 = vmatpush.bf16.xpose.msra.mxu0 0
        %726 = vmatpush.bf16.xpose.msra.mxu0 0
        %727 = vmatpush.bf16.xpose.msra.mxu0 0
        %728 = vmatpush.bf16.xpose.msra.mxu0 0
        %729 = vmatpush.bf16.xpose.msra.mxu0 0
        %730 = vmatpush.bf16.xpose.msra.mxu0 %v721
        %731 = vmatmul.bf16.gmra.mxu0 %v718
        %v732 = vpop.f32.mrf.mxu0
        %v733 = vadd.f32 %v447, %v732
        %v734 = vpop.f32.mrf.mxu0
        %v735 = vadd.f32 %v448, %v734
        %736 = vdwg.mxu0
        %v739 = vunpack.c.l.b16 %v625
        %v740 = vunpack.c.l.b16 %v626
        %v741 = vpack.c.b16 %v740, %v739
        %742 = vrot.lane.b32.xlu0 %v741, 64
        %v743 = vpop.permute.xlu0 %742
        %v745 = vsel %vm662, %v741, 0
        %v748 = vsel %vm662, %v743, 0
        %750 = vmatpush.bf16.xpose.msra.mxu0 0
        %751 = vmatpush.bf16.xpose.msra.mxu0 0
        %752 = vmatpush.bf16.xpose.msra.mxu0 0
        %753 = vmatpush.bf16.xpose.msra.mxu0 0
        %754 = vmatpush.bf16.xpose.msra.mxu0 0
        %755 = vmatpush.bf16.xpose.msra.mxu0 0
        %756 = vmatpush.bf16.xpose.msra.mxu0 0
        %757 = vmatpush.bf16.xpose.msra.mxu0 %v748
        %758 = vmatmul.bf16.gmra.mxu0 %v745
        %v759 = vpop.f32.mrf.mxu0
        %v760 = vadd.f32 %v447, %v759
        %v761 = vpop.f32.mrf.mxu0
        %v762 = vadd.f32 %v448, %v761
        %763 = vdwg.mxu0
        %v764 = vsel %vm662, %v679, -inf
        %765 = vmax.xlane.f32.xlu0 %v764
        %v766 = vpop.xlane.xlu0 %765
        %v767 = vsel %vm662, %v681, -inf
        %768 = vmax.xlane.f32.xlu0 %v767
        %v769 = vpop.xlane.xlu0 %768
        %v770 = vsel %vm662, %v706, -inf
        %771 = vmax.xlane.f32.xlu0 %v770
        %v772 = vpop.xlane.xlu0 %771
        %v773 = vsel %vm662, %v708, -inf
        %774 = vmax.xlane.f32.xlu0 %v773
        %v775 = vpop.xlane.xlu0 %774
        %v776 = vsel %vm662, %v733, -inf
        %777 = vmax.xlane.f32.xlu0 %v776
        %v778 = vpop.xlane.xlu0 %777
        %v779 = vsel %vm662, %v735, -inf
        %780 = vmax.xlane.f32.xlu0 %v779
        %v781 = vpop.xlane.xlu0 %780
        %v782 = vsel %vm662, %v760, -inf
        %783 = vmax.xlane.f32.xlu0 %v782
        %v784 = vpop.xlane.xlu0 %783
        %v785 = vsel %vm662, %v762, -inf
        %786 = vmax.xlane.f32.xlu0 %v785
        %v787 = vpop.xlane.xlu0 %786
        %v788 = vsub.f32 %v679, %v766
        %v789 = vsub.f32 %v681, %v769
        %v790 = vsub.f32 %v706, %v772
        %v791 = vsub.f32 %v708, %v775
        %v792 = vsub.f32 %v733, %v778
        %v793 = vsub.f32 %v735, %v781
        %v794 = vsub.f32 %v760, %v784
        %v795 = vsub.f32 %v762, %v787
        %v796 = vmul.f32 %v788, 1.442695
        %v797 = vpow.pop %v796
        %v798 = vmul.f32 %v789, 1.442695
        %v799 = vpow.pop %v798
        %v800 = vmul.f32 %v790, 1.442695
        %v801 = vpow.pop %v800
        %v802 = vmul.f32 %v791, 1.442695
        %v803 = vpow.pop %v802
        %v804 = vmul.f32 %v792, 1.442695
        %v805 = vpow.pop %v804
        %v806 = vmul.f32 %v793, 1.442695
        %v807 = vpow.pop %v806
        %v808 = vmul.f32 %v794, 1.442695
        %v809 = vpow.pop %v808
        %v810 = vmul.f32 %v795, 1.442695
        %v811 = vpow.pop %v810
        %v812 = vsel %vm662, %v797, 0.0
        %813 = vadd.xlane.f32.xlu0 %v812
        %v814 = vpop.xlane.xlu0 %813
        %v815 = vsel %vm662, %v799, 0.0
        %816 = vadd.xlane.f32.xlu0 %v815
        %v817 = vpop.xlane.xlu0 %816
        %v818 = vsel %vm662, %v801, 0.0
        %819 = vadd.xlane.f32.xlu0 %v818
        %v820 = vpop.xlane.xlu0 %819
        %v821 = vsel %vm662, %v803, 0.0
        %822 = vadd.xlane.f32.xlu0 %v821
        %v823 = vpop.xlane.xlu0 %822
        %v824 = vsel %vm662, %v805, 0.0
        %825 = vadd.xlane.f32.xlu0 %v824
        %v826 = vpop.xlane.xlu0 %825
        %v827 = vsel %vm662, %v807, 0.0
        %828 = vadd.xlane.f32.xlu0 %v827
        %v829 = vpop.xlane.xlu0 %828
        %v830 = vsel %vm662, %v809, 0.0
        %831 = vadd.xlane.f32.xlu0 %v830
        %v832 = vpop.xlane.xlu0 %831
        %v833 = vsel %vm662, %v811, 0.0
        %834 = vadd.xlane.f32.xlu0 %v833
        %v835 = vpop.xlane.xlu0 %834
        %v836 = vrcp.pop %v814
        %v837 = vrcp.pop %v817
        %v838 = vrcp.pop %v820
        %v839 = vrcp.pop %v823
        %v840 = vrcp.pop %v826
        %v841 = vrcp.pop %v829
        %v842 = vrcp.pop %v832
        %v843 = vrcp.pop %v835
        %v844 = vmul.f32 %v797, %v836
        %v845 = vmul.f32 %v799, %v837
        %v846 = vmul.f32 %v801, %v838
        %v847 = vmul.f32 %v803, %v839
        %v848 = vmul.f32 %v805, %v840
        %v849 = vmul.f32 %v807, %v841
        %v850 = vmul.f32 %v809, %v842
        %v851 = vmul.f32 %v811, %v843
        %v852 = vpack.c.bf16 %v844, %v844
        %v853 = vpack.c.bf16 %v845, %v845
        %v854 = vpack.c.bf16 %v846, %v846
        %v855 = vpack.c.bf16 %v847, %v847
        %v856 = vpack.c.bf16 %v848, %v848
        %v857 = vpack.c.bf16 %v849, %v849
        %v858 = vpack.c.bf16 %v850, %v850
        %v859 = vpack.c.bf16 %v851, %v851
        %v862 = vunpack.c.l.b16 %v852
        %v863 = vunpack.c.l.b16 %v853
        %v864 = vpack.c.b16 %v863, %v862
        %v867 = vunpack.c.l.b16 %v647
        %v868 = vunpack.c.l.b16 %v648
        %v869 = vpack.c.b16 %v868, %v867
        %v872 = vsel %vm662, %v864, 0
        %874 = vmatpush.bf16.msra.mxu0 0
        %875 = vmatpush.bf16.msra.mxu0 0
        %876 = vmatpush.bf16.msra.mxu0 0
        %877 = vmatpush.bf16.msra.mxu0 0
        %878 = vmatpush.bf16.msra.mxu0 0
        %879 = vmatpush.bf16.msra.mxu0 0
        %880 = vmatpush.bf16.msra.mxu0 0
        %881 = vmatpush.bf16.msra.mxu0 %v869
        %882 = vmatmul.bf16.gmra.mxu0 %v872
        %v883 = vpop.f32.mrf.mxu0
        %v884 = vadd.f32 0.0, %v883
        %v885 = vpop.f32.mrf.mxu0
        %v886 = vadd.f32 0.0, %v885
        %887 = vdwg.mxu0
        %v890 = vunpack.c.l.b16 %v854
        %v891 = vunpack.c.l.b16 %v855
        %v892 = vpack.c.b16 %v891, %v890
        %v895 = vunpack.c.l.b16 %v649
        %v896 = vunpack.c.l.b16 %v650
        %v897 = vpack.c.b16 %v896, %v895
        %v900 = vsel %vm662, %v892, 0
        %902 = vmatpush.bf16.msra.mxu0 0
        %903 = vmatpush.bf16.msra.mxu0 0
        %904 = vmatpush.bf16.msra.mxu0 0
        %905 = vmatpush.bf16.msra.mxu0 0
        %906 = vmatpush.bf16.msra.mxu0 0
        %907 = vmatpush.bf16.msra.mxu0 0
        %908 = vmatpush.bf16.msra.mxu0 0
        %909 = vmatpush.bf16.msra.mxu0 %v897
        %910 = vmatmul.bf16.gmra.mxu0 %v900
        %v911 = vpop.f32.mrf.mxu0
        %v912 = vadd.f32 0.0, %v911
        %v913 = vpop.f32.mrf.mxu0
        %v914 = vadd.f32 0.0, %v913
        %915 = vdwg.mxu0
        %v918 = vunpack.c.l.b16 %v856
        %v919 = vunpack.c.l.b16 %v857
        %v920 = vpack.c.b16 %v919, %v918
        %v923 = vunpack.c.l.b16 %v651
        %v924 = vunpack.c.l.b16 %v652
        %v925 = vpack.c.b16 %v924, %v923
        %v928 = vsel %vm662, %v920, 0
        %930 = vmatpush.bf16.msra.mxu0 0
        %931 = vmatpush.bf16.msra.mxu0 0
        %932 = vmatpush.bf16.msra.mxu0 0
        %933 = vmatpush.bf16.msra.mxu0 0
        %934 = vmatpush.bf16.msra.mxu0 0
        %935 = vmatpush.bf16.msra.mxu0 0
        %936 = vmatpush.bf16.msra.mxu0 0
        %937 = vmatpush.bf16.msra.mxu0 %v925
        %938 = vmatmul.bf16.gmra.mxu0 %v928
        %v939 = vpop.f32.mrf.mxu0
        %v940 = vadd.f32 0.0, %v939
        %v941 = vpop.f32.mrf.mxu0
        %v942 = vadd.f32 0.0, %v941
        %943 = vdwg.mxu0
        %v946 = vunpack.c.l.b16 %v858
        %v947 = vunpack.c.l.b16 %v859
        %v948 = vpack.c.b16 %v947, %v946
        %v951 = vunpack.c.l.b16 %v653
        %v952 = vunpack.c.l.b16 %v654
        %v953 = vpack.c.b16 %v952, %v951
        %v956 = vsel %vm662, %v948, 0
        %958 = vmatpush.bf16.msra.mxu0 0
        %959 = vmatpush.bf16.msra.mxu0 0
        %960 = vmatpush.bf16.msra.mxu0 0
        %961 = vmatpush.bf16.msra.mxu0 0
        %962 = vmatpush.bf16.msra.mxu0 0
        %963 = vmatpush.bf16.msra.mxu0 0
        %964 = vmatpush.bf16.msra.mxu0 0
        %965 = vmatpush.bf16.msra.mxu0 %v953
        %966 = vmatmul.bf16.gmra.mxu0 %v956
        %v967 = vpop.f32.mrf.mxu0
        %v968 = vadd.f32 0.0, %v967
        %v969 = vpop.f32.mrf.mxu0
        %v970 = vadd.f32 0.0, %v969
        %971 = vdwg.mxu0
        %974 = vrot.lane.b32.xlu0 %v912, 16
        %v975 = vpop.permute.xlu0 %974
        %976 = vrot.lane.b32.xlu0 %v914, 16
        %v977 = vpop.permute.xlu0 %976
        %982 = vrot.lane.b32.xlu0 %v940, 32
        %v983 = vpop.permute.xlu0 %982
        %984 = vrot.lane.b32.xlu0 %v942, 32
        %v985 = vpop.permute.xlu0 %984
        %990 = vrot.lane.b32.xlu0 %v968, 48
        %v991 = vpop.permute.xlu0 %990
        %992 = vrot.lane.b32.xlu0 %v970, 48
        %v993 = vpop.permute.xlu0 %992
        %v996 = vsel %vm662, %v884, %v975
        %v997 = vsel %vm662, %v886, %v977
        %vm998 = vcmask 261120
        %v999 = vsel %vm998, %v996, %v983
        %v1000 = vsel %vm998, %v997, %v985
        %vm1001 = vcmask 392192
        %v1002 = vsel %vm1001, %v999, %v991
        %v1003 = vsel %vm1001, %v1000, %v993
        %v1004 = vpack.c.bf16 %v1003, %v1002
        %v1005 = vld [vmem:[#allocation10] sm:$0xf]
        %v1006 = vld [vmem:[#allocation10 + $0x4] sm:$0xf]
        %v1007 = vld [vmem:[#allocation10 + $0x8] sm:$0xf]
        %v1008 = vld [vmem:[#allocation10 + $0xc] sm:$0xf]
        %v1009 = vld [vmem:[#allocation10 + $0x10] sm:$0xf]
        %v1010 = vld [vmem:[#allocation10 + $0x14] sm:$0xf]
        %v1011 = vld [vmem:[#allocation10 + $0x18] sm:$0xf]
        %v1012 = vld [vmem:[#allocation10 + $0x1c] sm:$0xf]
        %v1013 = vld [vmem:[%s7] sm:$0x1]
        %v1015 = vperm.slane %v1013, 0
        %v1025 = vunpack.c.l.b16 %v1005
        %v1026 = vunpack.c.l.b16 %v1006
        %v1027 = vunpack.c.l.b16 %v1007
        %v1028 = vunpack.c.l.b16 %v1008
        %v1029 = vunpack.c.l.b16 %v1009
        %v1030 = vunpack.c.l.b16 %v1010
        %v1031 = vunpack.c.l.b16 %v1011
        %v1032 = vunpack.c.l.b16 %v1012
        %v1033 = vpack.c.b16 %v1026, %v1025
        %v1034 = vpack.c.b16 %v1028, %v1027
        %v1035 = vpack.c.b16 %v1030, %v1029
        %v1036 = vpack.c.b16 %v1032, %v1031
        %v1042 = vsel %vm451, %v1004, 0
        %1044 = vmatpush.bf16.msra.mxu0 0
        %1045 = vmatpush.bf16.msra.mxu0 0
        %1046 = vmatpush.bf16.msra.mxu0 0
        %1047 = vmatpush.bf16.msra.mxu0 0
        %1048 = vmatpush.bf16.msra.mxu0 %v1036
        %1049 = vmatpush.bf16.msra.mxu0 %v1035
        %1050 = vmatpush.bf16.msra.mxu0 %v1034
        %1051 = vmatpush.bf16.msra.mxu0 %v1033
        %1052 = vmatmul.bf16.gmra.mxu0 %v1042
        %v1053 = vpop.f32.mrf.mxu0
        %v1054 = vadd.f32 %v1015, %v1053
        %v1055 = vpop.f32.mrf.mxu0
        %v1056 = vadd.f32 %v1015, %v1055
        %1057 = vdwg.mxu0
        %v1058 = vld [vmem:[%s8] sm:$0x1]
        %v1059 = vld [vmem:[%s9] sm:$0x1]
        %v1060 = vsel %vm451, %v1054, 0.0
        %1061 = vadd.xlane.f32.xlu0 %v1060
        %v1062 = vpop.xlane.xlu0 %1061
        %v1063 = vsel %vm451, %v1056, 0.0
        %1064 = vadd.xlane.f32.xlu0 %v1063
        %v1065 = vpop.xlane.xlu0 %1064
        %v1066 = vmul.f32 %v1062, %v464
        %v1067 = vmul.f32 %v1065, %v464
        %v1068 = vsub.f32 %v1054, %v1066
        %v1069 = vsub.f32 %v1056, %v1067
        %v1070 = vmul.f32 %v1068, %v1068
        %v1071 = vmul.f32 %v1069, %v1069
        %v1072 = vsel %vm451, %v1070, 0.0
        %1073 = vadd.xlane.f32.xlu0 %v1072
        %v1074 = vpop.xlane.xlu0 %1073
        %v1075 = vsel %vm451, %v1071, 0.0
        %1076 = vadd.xlane.f32.xlu0 %v1075
        %v1077 = vpop.xlane.xlu0 %1076
        %v1078 = vmul.f32 %v1074, %v464
        %v1079 = vmul.f32 %v1077, %v464
        %v1080 = vadd.f32 %v1078, 1e-05
        %v1081 = vadd.f32 %v1079, 1e-05
        %v1082 = vrsqrt.pop %v1080
        %v1083 = vmul.f32 %v1082, %v1080
        %v1084 = vmul.f32 %v1083, %v1082
        %v1085 = vmul.f32 0.5, %v1084
        %v1086 = vsub.f32 1.5, %v1085
        %v1087 = vmul.f32 %v1082, %v1086
        %vm1088 = vweird.f32 %v1080
        %vm1089 = vweird.f32 %v1082
        %vm1090 = vmor %vm1088, %vm1089
        %v1091 = vsel %vm1090, %v1082, %v1087
        %v1092 = vrsqrt.pop %v1081
        %v1093 = vmul.f32 %v1092, %v1081
        %v1094 = vmul.f32 %v1093, %v1092
        %v1095 = vmul.f32 0.5, %v1094
        %v1096 = vsub.f32 1.5, %v1095
        %v1097 = vmul.f32 %v1092, %v1096
        %vm1098 = vweird.f32 %v1081
        %vm1099 = vweird.f32 %v1092
        %vm1100 = vmor %vm1098, %vm1099
        %v1101 = vsel %vm1100, %v1092, %v1097
        %v1102 = vmul.f32 %v1068, %v1091
        %v1103 = vmul.f32 %v1069, %v1101
        %v1105 = vperm.slane %v1058, 0
        %v1107 = vmul.f32 %v1102, %v1105
        %v1108 = vmul.f32 %v1103, %v1105
        %v1110 = vperm.slane %v1059, 0
        %v1112 = vadd.f32 %v1107, %v1110
        %v1113 = vadd.f32 %v1108, %v1110
        %v1114 = vadd.f32 %v445, %v1112
        %v1115 = vadd.f32 %v446, %v1113
        %1116 = vst.msk [vmem:[%s443] sm:$0xff] %vm451, %v1114
        %1117 = vst.msk [vmem:[%s443 + $0x8] sm:$0xff] %vm451, %v1115
        %s1118 = sand.u32 %s252, 1
        %s1119 = scalar_lea.sflag [#allocation4], %s1118
        %s1120 = sand.u32 %s252, 1
        %s1121 = smul.addr %s1120, 16
        %s1122 = scalar_lea.vmem [#allocation11], %s1121
        // Predicated region
        $region81: #{tpu_custom_call.1} parent=59 // pred_check
          %p1123 = pneg %p262
        $region82: #{tpu_custom_call.1} parent=59 // pred_check_branch
          %1125 = sbr.rel (%p1123) target = $region84
        $region83: #{tpu_custom_call.1} parent=59 // pred_region
          %1127 = vsyncadd %s1119, 0
          %s1128 = smul.addr %s29, 2
          %s1129 = smul.addr %s1128, 8
          %s1130 = scalar_lea.hbm %s10, %s1129
          %s1131 = sshll.u32 %s1122, 4
          %s1132 = int_to_ptr.vmem [resolvable:$true] %s1131
          %s1133 = sshll.u32 %s1130, 4
          %s1134 = int_to_ptr.hbm [resolvable:$true] %s1133
          %1139 = dma.vmem_to_hbm [thread:$0]  %s1132, 256, %s1134, %s1119, 128, 128, 8
        $region84: #{tpu_custom_call.1} parent=59 // pred_fallthru
          _
      $region60: #{tpu_custom_call.1} parent=5 // pred_fallthru
        _
      %p1140 = scmp.le.s32.totalorder 2, %s24
      // Predicated region
      $region85: #{tpu_custom_call.1} parent=5 // pred_check
        %p1141 = pneg %p1140
      $region86: #{tpu_custom_call.1} parent=5 // pred_check_branch
        %1143 = sbr.rel (%p1141) target = $region88
      $region87: #{tpu_custom_call.1} parent=5 // pred_region
        %s1144 = ssub.s32 %s24, 2
        // Predicated region
        $region89: #{tpu_custom_call.1} parent=87 // pred_check
          %p1145 = pneg %p268
        $region90: #{tpu_custom_call.1} parent=87 // pred_check_branch
          %1147 = sbr.rel (%p1145) target = $region92
        $region91: #{tpu_custom_call.1} parent=87 // pred_region
          %s1148 = sand.u32 %s253, 1
          %s1149 = scalar_lea.sflag [#allocation4], %s1148
          %s1150 = sand.u32 %s253, 1
          %s1151 = smul.addr %s1150, 16
          %s1152 = scalar_lea.vmem [#allocation11], %s1151
          %1154 = dma.done %s1149, 256
        $region92: #{tpu_custom_call.1} parent=87 // pred_fallthru
          _
      $region88: #{tpu_custom_call.1} parent=5 // pred_fallthru
        _
    $region6: #{tpu_custom_call.1} parent=1 // loop_footer
      %s28 = sadd.s32 1, %s24
    $region7: #{tpu_custom_call.1} parent=1 // loop_footer_branch
      %23 = sbr.rel target = $region3
    $region8: #{tpu_custom_call.1} parent=1 // loop_exit
      _
    %1155 = vsyncpa [#allocation3], 1
    %s1156 = scalar_lea.sflag [#allocation3], 1
    %1157 = vsyncpa %s1156, 1
    %1158 = vsyncpa [#allocation6], 1
    %1159 = vsyncpa [#allocation9], 1
    %1160 = vsyncpa [#allocation4], 1
    %s1161 = scalar_lea.sflag [#allocation4], 1
    %1162 = vsyncpa %s1161, 1

</llo_original>
